<compile_context>
chip_gen: v5e
topology: v5e:2x2
jax: 0.10.0
libtpu: 0.0.40
codegen_flags: <defaults>
</compile_context>

<pallas_src>
import math

import jax
import jax.numpy as jnp
from jax.experimental import pallas as pl
from jax.experimental.pallas import tpu as pltpu


def _round_up(x: int, m: int) -> int:
    return ((x + m - 1) // m) * m


# -----------------------------------------------------------------------------
# Deterministic change-of-basis for formula "ij=ji"  (irreps 1x0e + 1x2e).
# Orthonormal basis of symmetric 3x3 matrices in e3nn's (y, z, x) axis order.
# Index 0 -> 0e (trace part), indices 1..5 -> 2e (traceless symmetric, m=-2..2).
# TODO(synk): e3nn's ReducedTensorProducts("ij=ji") may use different signs /
# ordering for the 2e components; this Q is a valid orthonormal change of basis
# but is not guaranteed bit-identical to e3nn's.
# -----------------------------------------------------------------------------
def make_change_of_basis() -> jnp.ndarray:
    Q = [[[0.0] * 3 for _ in range(3)] for _ in range(6)]
    s3 = 1.0 / math.sqrt(3.0)
    for a in range(3):
        Q[0][a][a] = s3                                           # 0e: identity/sqrt(3)
    s2 = 1.0 / math.sqrt(2.0)
    s6 = 1.0 / math.sqrt(6.0)
    # axis order (y, z, x): 0=y, 1=z, 2=x
    Q[1][2][0] = s2; Q[1][0][2] = s2                              # 2e, m=-2 ~ xy
    Q[2][0][1] = s2; Q[2][1][0] = s2                              # 2e, m=-1 ~ yz
    Q[3][0][0] = -s6; Q[3][1][1] = 2.0 * s6; Q[3][2][2] = -s6     # 2e, m=0
    Q[4][1][2] = s2; Q[4][2][1] = s2                              # 2e, m=+1 ~ zx
    Q[5][0][0] = -s2; Q[5][2][2] = s2                             # 2e, m=+2 ~ x^2-y^2
    return jnp.asarray(Q, dtype=jnp.float32)                      # (6, 3, 3)


# -----------------------------------------------------------------------------
# Kernel: one block load, one MXU dot, one block store.
#   x_ref: (tile, 6)   node irreps features
#   q_ref: (6, 9)      flattened change of basis
#   o_ref: (tile, 9)   flattened 3x3 Cartesian components
# -----------------------------------------------------------------------------
def _to_cartesian_kernel(x_ref, q_ref, o_ref):
    x = x_ref[...].astype(jnp.float32)
    q = q_ref[...].astype(jnp.float32)
    out = jnp.dot(x, q, preferred_element_type=jnp.float32)       # MXU, f32 acc
    o_ref[...] = out.astype(o_ref.dtype)


# -----------------------------------------------------------------------------
# Tiling: blocks (tile,6)/(tile,9) lane-pad to (tile,128) f32 in VMEM, i.e.
# ~2 KiB per row once double-buffered.  Pick the biggest tile the chip's VMEM
# comfortably allows; cap so large inputs keep >=2 grid steps (v7x dual-TC).
# -----------------------------------------------------------------------------
_LANE = 128
_VMEM_BYTES_PER_ROW = 2 * (2 * _LANE * 4)      # in + out blocks, double-buffered


def _vmem_plan() -> tuple[int, int]:
    """(block_vmem_budget_bytes, vmem_limit_bytes) for the current chip."""
    try:
        cap = int(getattr(pltpu.get_tpu_info(), "vmem_capacity_bytes", 64 << 20))
    except Exception:  # pragma: no cover - conservative (v7x-sized) fallback
        cap = 64 << 20
    block_budget = min(cap * 3 // 8, 48 << 20)  # 48 MiB on 128 MiB parts, 24 MiB on v7x
    vmem_limit = min(cap // 2, 64 << 20)        # never reuse 128 MiB-part limits on v7x
    return block_budget, vmem_limit


def _choose_tile(n: int, block_budget: int) -> int:
    tile = max(1024, block_budget // _VMEM_BYTES_PER_ROW)
    if n > 4096:
        # keep at least 2 grid steps so both v7x TensorCores get work
        tile = min(tile, _round_up((n + 1) // 2, 8))
    tile = min(tile, _round_up(n, 8))           # small-N clamp (sublane multiple)
    return max(8, (tile // 8) * 8)


def irreps_to_cartesian(x: jnp.ndarray, change_of_basis=None) -> jnp.ndarray:
    """x: (N, 6) irreps features (1x0e+1x2e).  Returns (N, 3, 3) symmetric tensors."""
    n, d = x.shape
    assert d == 6, "formula ij=ji expects irreps dim 6 (1x0e + 1x2e)"

    q = make_change_of_basis() if change_of_basis is None else change_of_basis
    q2d = q.reshape(6, 9).astype(jnp.float32)   # free reshape, tiny operand

    block_budget, vmem_limit = _vmem_plan()
    tile = _choose_tile(n, block_budget)
    grid = (pl.cdiv(n, tile),)                  # ragged N: last block is masked

    out2d = pl.pallas_call(
        _to_cartesian_kernel,
        out_shape=jax.ShapeDtypeStruct((n, 9), x.dtype),
        grid_spec=pltpu.PrefetchScalarGridSpec(
            num_scalar_prefetch=0,
            grid=grid,
            in_specs=[
                pl.BlockSpec((tile, 6), lambda i: (i, 0)),
                pl.BlockSpec((6, 9), lambda i: (0, 0)),
            ],
            out_specs=pl.BlockSpec((tile, 9), lambda i: (i, 0)),
        ),
        compiler_params=pltpu.CompilerParams(
            dimension_semantics=("parallel",),
            vmem_limit_bytes=vmem_limit,
        ),
        cost_estimate=pl.CostEstimate(
            flops=2 * 6 * 9 * n,
            transcendentals=0,
            bytes_accessed=(6 + 9) * x.dtype.itemsize * n + q2d.size * 4,
        ),
    )(x, q2d)

    return out2d.reshape(n, 3, 3)               # free reshape (contiguous)


# -----------------------------------------------------------------------------
# Module-like wrapper mirroring IrrepsToCartesianTensor.forward:
#   data[out_field] = ct.to_cartesian(data[field])
# -----------------------------------------------------------------------------
class IrrepsToCartesianTensorPallas:
    def __init__(self, formula: str = "ij=ji",
                 field: str = "node_features", out_field=None):
        assert formula == "ij=ji", \
            "only the symmetric 2nd-order tensor formula is implemented"
        self.formula = formula
        self.field = field
        self.out_field = field if out_field is None else out_field
        self.change_of_basis = make_change_of_basis()   # (6, 3, 3), fixed buffer

    def __call__(self, data: dict) -> dict:
        value = data[self.field]                                  # (N, 6)
        data[self.out_field] = irreps_to_cartesian(value, self.change_of_basis)
        return data

    def __repr__(self):
        return (f"{self.__class__.__name__}(\n  field: {self.field}, "
                f"out_field: {self.out_field}, formula: {self.formula}\n)")


# -----------------------------------------------------------------------------
# Pure-JAX reference for correctness check.
# -----------------------------------------------------------------------------
def _reference(x, q):
    return jnp.einsum("ni,iab->nab", x, q)


if __name__ == "__main__":
    key = jax.random.PRNGKey(0)
    # Small but deliberately ragged N (> 4096, not a tile multiple): exercises
    # the 2-step grid and the masked last block.
    N = 4100
    x = jax.random.normal(key, (N, 6), dtype=jnp.float32)

    module = IrrepsToCartesianTensorPallas(formula="ij=ji",
                                           field="node_features",
                                           out_field="cartesian_tensor")
    data = module({"node_features": x})
    out = jax.block_until_ready(data["cartesian_tensor"])

    ref = _reference(x, module.change_of_basis)
    assert out.shape == (N, 3, 3)
    assert jnp.allclose(out, ref, atol=1e-5, rtol=1e-5)
    # symmetry check: ij = ji
    assert jnp.allclose(out, jnp.swapaxes(out, -1, -2), atol=1e-5)

    print("KERNEL_OK")
</pallas_src>

<mosaic_0001>
module attributes {stable_mosaic.version = 11 : i64} {
  func.func @_to_cartesian_kernel(%arg0: i32, %arg1: memref<2056x6xf32, #tpu.memory_space<vmem>>, %arg2: memref<6x9xf32, #tpu.memory_space<vmem>>, %arg3: memref<2056x9xf32, #tpu.memory_space<vmem>>) attributes {dimension_semantics = [#tpu.dimension_semantics<parallel>], iteration_bounds = array<i64: 2>, scalar_prefetch = 0 : i64, scratch_operands = 0 : i64, tpu.core_type = #tpu.core_type<tc>, window_params = [{transform_indices = @transform_0, window_bounds = array<i64: 2056, 6>}, {pipeline_mode = #tpu.pipeline_mode<synchronous>, transform_indices = @transform_1, window_bounds = array<i64: 6, 9>}, {transform_indices = @transform_2, window_bounds = array<i64: 2056, 9>}]} {
    %c0 = arith.constant 0 : index
    %c0_0 = arith.constant 0 : index
    %0 = vector.load %arg1[%c0, %c0_0] : memref<2056x6xf32, #tpu.memory_space<vmem>>, vector<2056x6xf32>
    %c0_1 = arith.constant 0 : index
    %c0_2 = arith.constant 0 : index
    %1 = vector.load %arg2[%c0_1, %c0_2] : memref<6x9xf32, #tpu.memory_space<vmem>>, vector<6x9xf32>
    %cst = arith.constant dense<0.000000e+00> : vector<2056x9xf32>
    %2 = tpu.matmul %0, %1, %cst {dimension_numbers = #tpu.dot_dimension_numbers<[1], [0], [0], [1], [0, 0, 1, 1], [], []>} : vector<2056x6xf32>, vector<6x9xf32>, vector<2056x9xf32> -> vector<2056x9xf32>
    %c0_3 = arith.constant 0 : index
    %c0_4 = arith.constant 0 : index
    %3 = vector.load %arg3[%c0_3, %c0_4] : memref<2056x9xf32, #tpu.memory_space<vmem>>, vector<2056x9xf32>
    tpu.vector_store %arg3[%c0_3, %c0_4], %2 {strides = array<i32>} : memref<2056x9xf32, #tpu.memory_space<vmem>>, vector<2056x9xf32>,
    return
  }
  func.func @transform_0(%arg0: i32) -> (i32, i32) {
    %c0_i32 = arith.constant 0 : i32
    %c0_i32_0 = arith.constant 0 : i32
    return %arg0, %c0_i32 : i32, i32
  }
  func.func @transform_1(%arg0: i32) -> (i32, i32) {
    %c0_i32 = arith.constant 0 : i32
    %c0_i32_0 = arith.constant 0 : i32
    %c0_i32_1 = arith.constant 0 : i32
    return %c0_i32, %c0_i32_0 : i32, i32
  }
  func.func @transform_2(%arg0: i32) -> (i32, i32) {
    %c0_i32 = arith.constant 0 : i32
    %c0_i32_0 = arith.constant 0 : i32
    return %arg0, %c0_i32 : i32, i32
  }
}

</mosaic_0001>

<llo_original>
// kernel: tpu_custom_call.1
$region0: #{tpu_custom_call.1}
  #allocation0 [shape = 'u32[]', space=smem, size = 0x4, offset = 0x4, fixed_abs, tag = 'smem constant byte address 0x4 - core index']
  #allocation1 [shape = 'u32[72,128]{1,0:T(1,128)}', space=vmem, size = 0x9000, scoped, tag = 'internal scratch']
  %s0 = inlined_call_operand.vmem [shape: f32[4100,6], index: 0, kind: input, shape index: {}]
  %s1 = inlined_call_operand.vmem [shape: f32[6,9], index: 1, kind: input, shape index: {}]
  %s2 = inlined_call_operand.vmem [shape: f32[4100,9], index: 2, kind: output, shape index: {}]
  %s3 = sld [smem:[#allocation0]]
  $region89: #{tpu_custom_call.1} parent=0
    _
  %s5 = ssub.s32 1, %s3
  %s6 = scalar_select 0, %s5, %s3
  $region1: #{tpu_custom_call.1} parent=0
    #allocation2 [shape = 'u8[2105344]{0}', space=vmem, size = 0x202000, scoped, tag = 'output window, operand 0']
    loop: start=0, step=1, limit=4
    $region2: #{tpu_custom_call.1} parent=1 // loop_pre_header
      _
    $region3: #{tpu_custom_call.1} parent=1 // loop_header
      %s8 = sphi 0, %s12
      %p9 = scmp.ge.s32.totalorder %s8, 4
      %s18 = sphi 0, %s20
      %s21 = sphi 0, %s18
      %s22 = sphi 0, %s21
      %s38 = sphi 0, %s22
      %s42 = sphi 0, %s42
      %s44 = sphi 0, %s42
      %s45 = sphi 0, %s44
      %s59 = sphi 0, %s45
      %s65 = sphi 0, %s67
      %s68 = sphi 0, %s65
      %s69 = sphi 0, %s68
      %s85 = sphi 0, %s69
    $region4: #{tpu_custom_call.1} parent=1 // loop_header_branch
      %11 = sbr.rel (%p9) target = $region8
    $region5: #{tpu_custom_call.1} parent=1 // loop_body
      %s13 = ssub.s32 %s8, 1
      %s14 = ssub.s32 %s8, 2
      %s15 = sadd.s32 %s8, 1
      %s16 = ssub.s32 %s8, %s15
      %p17 = scmp.eq.s32.totalorder %s16, 0
      %s19 = sadd.s32 %s18, 1
      %s20 = scalar_select %p17, %s18, %s19
      %p23 = pneg %p17
      %p24 = scmp.eq.s32.totalorder %s8, 1
      %p25 = por %p23, %p24
      %p26 = scmp.ne.s32.totalorder %s18, %s21
      %p27 = scmp.eq.s32.totalorder %s8, 0
      %p28 = por %p26, %p27
      %p29 = scmp.ne.s32.totalorder %s18, %s21
      %p30 = scmp.eq.s32.totalorder %s13, 1
      %p31 = por %p29, %p30
      %p32 = scmp.ne.s32.totalorder %s21, %s22
      %p33 = scmp.eq.s32.totalorder %s13, 0
      %p34 = por %p32, %p33
      %p35 = scmp.ne.s32.totalorder %s21, %s22
      %p36 = scmp.eq.s32.totalorder %s14, 1
      %p37 = por %p35, %p36
      %p39 = scmp.ne.s32.totalorder %s22, %s38
      %p40 = scmp.eq.s32.totalorder %s14, 0
      %p41 = por %p39, %p40
      %s43 = sadd.s32 %s42, 1
      %p46 = scmp.eq.s32.totalorder %s8, 1
      %p47 = scmp.ne.s32.totalorder %s42, %s44
      %p48 = scmp.eq.s32.totalorder %s8, 0
      %p49 = por %p47, %p48
      %p50 = scmp.ne.s32.totalorder %s42, %s44
      %p51 = scmp.eq.s32.totalorder %s13, 1
      %p52 = por %p50, %p51
      %p53 = scmp.ne.s32.totalorder %s44, %s45
      %p54 = scmp.eq.s32.totalorder %s13, 0
      %p55 = por %p53, %p54
      %p56 = scmp.ne.s32.totalorder %s44, %s45
      %p57 = scmp.eq.s32.totalorder %s14, 1
      %p58 = por %p56, %p57
      %p60 = scmp.ne.s32.totalorder %s45, %s59
      %p61 = scmp.eq.s32.totalorder %s14, 0
      %p62 = por %p60, %p61
      %s63 = ssub.s32 %s8, %s15
      %p64 = scmp.eq.s32.totalorder %s63, 0
      %s66 = sadd.s32 %s65, 1
      %s67 = scalar_select %p64, %s65, %s66
      %p70 = pneg %p64
      %p71 = scmp.eq.s32.totalorder %s8, 1
      %p72 = por %p70, %p71
      %p73 = scmp.ne.s32.totalorder %s65, %s68
      %p74 = scmp.eq.s32.totalorder %s8, 0
      %p75 = por %p73, %p74
      %p76 = scmp.ne.s32.totalorder %s65, %s68
      %p77 = scmp.eq.s32.totalorder %s13, 1
      %p78 = por %p76, %p77
      %p79 = scmp.ne.s32.totalorder %s68, %s69
      %p80 = scmp.eq.s32.totalorder %s13, 0
      %p81 = por %p79, %p80
      %p82 = scmp.ne.s32.totalorder %s68, %s69
      %p83 = scmp.eq.s32.totalorder %s14, 1
      %p84 = por %p82, %p83
      %p86 = scmp.ne.s32.totalorder %s69, %s85
      %p87 = scmp.eq.s32.totalorder %s14, 0
      %p88 = por %p86, %p87
      %p89 = scmp.le.s32.totalorder 1, %s8
      %p90 = scmp.lt.s32.totalorder %s8, 3
      %p91 = pnand %p89, %p90
      %p92 = pneg %p91
      // Predicated region
      $region9: #{tpu_custom_call.1} parent=5 // pred_check
        _
      $region10: #{tpu_custom_call.1} parent=5 // pred_check_branch
        %94 = sbr.rel (%p91) target = $region12
      $region11: #{tpu_custom_call.1} parent=5 // pred_region
        %s95 = ssub.s32 %s8, 1
        // Predicated region
        $region13: #{tpu_custom_call.1} parent=11 // pred_check
          %p96 = pneg %p55
        $region14: #{tpu_custom_call.1} parent=11 // pred_check_branch
          %98 = sbr.rel (%p96) target = $region16
        $region15: #{tpu_custom_call.1} parent=11 // pred_region
          _
        $region16: #{tpu_custom_call.1} parent=11 // pred_fallthru
          _
      $region12: #{tpu_custom_call.1} parent=5 // pred_fallthru
        _
      %p99 = scmp.lt.s32.totalorder %s8, 2
      // Predicated region
      $region17: #{tpu_custom_call.1} parent=5 // pred_check
        %p100 = pneg %p99
      $region18: #{tpu_custom_call.1} parent=5 // pred_check_branch
        %102 = sbr.rel (%p100) target = $region20
      $region19: #{tpu_custom_call.1} parent=5 // pred_region
        // Predicated region
        $region21: #{tpu_custom_call.1} parent=19 // pred_check
          %p103 = pneg %p28
        $region22: #{tpu_custom_call.1} parent=19 // pred_check_branch
          %105 = sbr.rel (%p103) target = $region24
        $region23: #{tpu_custom_call.1} parent=19 // pred_region
          %s106 = smul.u32 257, %s8
          %s107 = ssub.s32 513, %s106
          %p108 = scmp.lt.s32.totalorder %s107, 257
          %s109 = scalar_select %p108, %s107, 257
          %s110 = smul.u32 8, %s109
          %p111 = scmp.lt.s32.totalorder %s106, 512
          %s112 = scalar_select %p111, %s106, 512
          %s113 = smul.addr %s112, 8
          %s114 = scalar_lea.vmem %s0, %s113
          %s115 = smul.u32 257, %s8
          %s116 = ssub.s32 513, %s115
          %p117 = scmp.lt.s32.totalorder %s116, 257
          %s118 = scalar_select %p117, %s116, 257
          %s119 = smul.u32 8, %s118
        $region24: #{tpu_custom_call.1} parent=19 // pred_fallthru
          _
      $region20: #{tpu_custom_call.1} parent=5 // pred_fallthru
        _
      %p120 = scmp.le.s32.totalorder 1, %s8
      %p121 = scmp.lt.s32.totalorder %s8, 3
      %p122 = pnand %p120, %p121
      %p123 = pneg %p122
      // Predicated region
      $region25: #{tpu_custom_call.1} parent=5 // pred_check
        _
      $region26: #{tpu_custom_call.1} parent=5 // pred_check_branch
        %125 = sbr.rel (%p122) target = $region28
      $region27: #{tpu_custom_call.1} parent=5 // pred_region
        %s126 = ssub.s32 %s8, 1
        %s127 = smul.u32 257, %s13
        %s128 = ssub.s32 513, %s127
        %p129 = scmp.lt.s32.totalorder %s128, 257
        %s130 = scalar_select %p129, %s128, 257
        %s131 = smul.u32 8, %s130
        %p132 = scmp.lt.s32.totalorder %s127, 512
        %s133 = scalar_select %p132, %s127, 512
        %s134 = smul.addr %s133, 8
        %s135 = scalar_lea.vmem %s0, %s134
        %p136 = pneg %p34
        %p137 = pneg %p31
        %p138 = pneg %p55
        %p139 = pneg %p52
        %p140 = pneg %p81
        %p141 = pneg %p78
        %s142 = sand.u32 %s68, 1
        %s143 = sand.u32 %s68, 1
        %s144 = smul.addr %s143, 2056
        %s145 = scalar_lea.vmem [#allocation2], %s144
        %s146 = smul.u32 257, %s13
        %s147 = ssub.s32 513, %s146
        %p148 = scmp.lt.s32.totalorder %s147, 257
        %s149 = scalar_select %p148, %s147, 257
        %s150 = smul.u32 8, %s149
        %p151 = scmp.lt.s32.totalorder %s146, 512
        %s152 = scalar_select %p151, %s146, 512
        %s153 = smul.addr %s152, 8
        %s154 = scalar_lea.vmem %s0, %s153
        %s155 = smul.u32 257, %s13
        %s156 = ssub.s32 513, %s155
        %p157 = scmp.lt.s32.totalorder %s156, 257
        %s158 = scalar_select %p157, %s156, 257
        %s159 = smul.u32 8, %s158
        %s160 = smul.u32 257, %s13
        %s161 = ssub.s32 513, %s160
        %p162 = scmp.lt.s32.totalorder %s161, 257
        %s163 = scalar_select %p162, %s161, 257
        %s164 = smul.u32 8, %s163
        %v165 = vld [vmem:[%s154] sm:$0xff]
        %v166 = vld [vmem:[%s154 + $0x8] sm:$0xff]
        %v167 = vld [vmem:[%s154 + $0x10] sm:$0xff]
        %v168 = vld [vmem:[%s154 + $0x18] sm:$0xff]
        %v169 = vld [vmem:[%s154 + $0x20] sm:$0xff]
        %v170 = vld [vmem:[%s154 + $0x28] sm:$0xff]
        %v171 = vld [vmem:[%s154 + $0x30] sm:$0xff]
        %v172 = vld [vmem:[%s154 + $0x38] sm:$0xff]
        %v173 = vld [vmem:[%s154 + $0x40] sm:$0xff]
        %v174 = vld [vmem:[%s154 + $0x48] sm:$0xff]
        %v175 = vld [vmem:[%s154 + $0x50] sm:$0xff]
        %v176 = vld [vmem:[%s154 + $0x58] sm:$0xff]
        %v177 = vld [vmem:[%s154 + $0x60] sm:$0xff]
        %v178 = vld [vmem:[%s154 + $0x68] sm:$0xff]
        %v179 = vld [vmem:[%s154 + $0x70] sm:$0xff]
        %v180 = vld [vmem:[%s154 + $0x78] sm:$0xff]
        %v181 = vld [vmem:[%s154 + $0x80] sm:$0xff]
        %v182 = vld [vmem:[%s154 + $0x88] sm:$0xff]
        %v183 = vld [vmem:[%s154 + $0x90] sm:$0xff]
        %v184 = vld [vmem:[%s154 + $0x98] sm:$0xff]
        %v185 = vld [vmem:[%s154 + $0xa0] sm:$0xff]
        %v186 = vld [vmem:[%s154 + $0xa8] sm:$0xff]
        %v187 = vld [vmem:[%s154 + $0xb0] sm:$0xff]
        %v188 = vld [vmem:[%s154 + $0xb8] sm:$0xff]
        %v189 = vld [vmem:[%s154 + $0xc0] sm:$0xff]
        %v190 = vld [vmem:[%s154 + $0xc8] sm:$0xff]
        %v191 = vld [vmem:[%s154 + $0xd0] sm:$0xff]
        %v192 = vld [vmem:[%s154 + $0xd8] sm:$0xff]
        %v193 = vld [vmem:[%s154 + $0xe0] sm:$0xff]
        %v194 = vld [vmem:[%s154 + $0xe8] sm:$0xff]
        %v195 = vld [vmem:[%s154 + $0xf0] sm:$0xff]
        %v196 = vld [vmem:[%s154 + $0xf8] sm:$0xff]
        %v197 = vld [vmem:[%s154 + $0x100] sm:$0xff]
        %v198 = vld [vmem:[%s154 + $0x108] sm:$0xff]
        %v199 = vld [vmem:[%s154 + $0x110] sm:$0xff]
        %v200 = vld [vmem:[%s154 + $0x118] sm:$0xff]
        %v201 = vld [vmem:[%s154 + $0x120] sm:$0xff]
        %v202 = vld [vmem:[%s154 + $0x128] sm:$0xff]
        %v203 = vld [vmem:[%s154 + $0x130] sm:$0xff]
        %v204 = vld [vmem:[%s154 + $0x138] sm:$0xff]
        %v205 = vld [vmem:[%s154 + $0x140] sm:$0xff]
        %v206 = vld [vmem:[%s154 + $0x148] sm:$0xff]
        %v207 = vld [vmem:[%s154 + $0x150] sm:$0xff]
        %v208 = vld [vmem:[%s154 + $0x158] sm:$0xff]
        %v209 = vld [vmem:[%s154 + $0x160] sm:$0xff]
        %v210 = vld [vmem:[%s154 + $0x168] sm:$0xff]
        %v211 = vld [vmem:[%s154 + $0x170] sm:$0xff]
        %v212 = vld [vmem:[%s154 + $0x178] sm:$0xff]
        %v213 = vld [vmem:[%s154 + $0x180] sm:$0xff]
        %v214 = vld [vmem:[%s154 + $0x188] sm:$0xff]
        %v215 = vld [vmem:[%s154 + $0x190] sm:$0xff]
        %v216 = vld [vmem:[%s154 + $0x198] sm:$0xff]
        %v217 = vld [vmem:[%s154 + $0x1a0] sm:$0xff]
        %v218 = vld [vmem:[%s154 + $0x1a8] sm:$0xff]
        %v219 = vld [vmem:[%s154 + $0x1b0] sm:$0xff]
        %v220 = vld [vmem:[%s154 + $0x1b8] sm:$0xff]
        %v221 = vld [vmem:[%s154 + $0x1c0] sm:$0xff]
        %v222 = vld [vmem:[%s154 + $0x1c8] sm:$0xff]
        %v223 = vld [vmem:[%s154 + $0x1d0] sm:$0xff]
        %v224 = vld [vmem:[%s154 + $0x1d8] sm:$0xff]
        %v225 = vld [vmem:[%s154 + $0x1e0] sm:$0xff]
        %v226 = vld [vmem:[%s154 + $0x1e8] sm:$0xff]
        %v227 = vld [vmem:[%s154 + $0x1f0] sm:$0xff]
        %v228 = vld [vmem:[%s154 + $0x1f8] sm:$0xff]
        %v229 = vld [vmem:[%s154 + $0x200] sm:$0xff]
        %v230 = vld [vmem:[%s154 + $0x208] sm:$0xff]
        %v231 = vld [vmem:[%s154 + $0x210] sm:$0xff]
        %v232 = vld [vmem:[%s154 + $0x218] sm:$0xff]
        %v233 = vld [vmem:[%s154 + $0x220] sm:$0xff]
        %v234 = vld [vmem:[%s154 + $0x228] sm:$0xff]
        %v235 = vld [vmem:[%s154 + $0x230] sm:$0xff]
        %v236 = vld [vmem:[%s154 + $0x238] sm:$0xff]
        %v237 = vld [vmem:[%s154 + $0x240] sm:$0xff]
        %v238 = vld [vmem:[%s154 + $0x248] sm:$0xff]
        %v239 = vld [vmem:[%s154 + $0x250] sm:$0xff]
        %v240 = vld [vmem:[%s154 + $0x258] sm:$0xff]
        %v241 = vld [vmem:[%s154 + $0x260] sm:$0xff]
        %v242 = vld [vmem:[%s154 + $0x268] sm:$0xff]
        %v243 = vld [vmem:[%s154 + $0x270] sm:$0xff]
        %v244 = vld [vmem:[%s154 + $0x278] sm:$0xff]
        %v245 = vld [vmem:[%s154 + $0x280] sm:$0xff]
        %v246 = vld [vmem:[%s154 + $0x288] sm:$0xff]
        %v247 = vld [vmem:[%s154 + $0x290] sm:$0xff]
        %v248 = vld [vmem:[%s154 + $0x298] sm:$0xff]
        %v249 = vld [vmem:[%s154 + $0x2a0] sm:$0xff]
        %v250 = vld [vmem:[%s154 + $0x2a8] sm:$0xff]
        %v251 = vld [vmem:[%s154 + $0x2b0] sm:$0xff]
        %v252 = vld [vmem:[%s154 + $0x2b8] sm:$0xff]
        %v253 = vld [vmem:[%s154 + $0x2c0] sm:$0xff]
        %v254 = vld [vmem:[%s154 + $0x2c8] sm:$0xff]
        %v255 = vld [vmem:[%s154 + $0x2d0] sm:$0xff]
        %v256 = vld [vmem:[%s154 + $0x2d8] sm:$0xff]
        %v257 = vld [vmem:[%s154 + $0x2e0] sm:$0xff]
        %v258 = vld [vmem:[%s154 + $0x2e8] sm:$0xff]
        %v259 = vld [vmem:[%s154 + $0x2f0] sm:$0xff]
        %v260 = vld [vmem:[%s154 + $0x2f8] sm:$0xff]
        %v261 = vld [vmem:[%s154 + $0x300] sm:$0xff]
        %v262 = vld [vmem:[%s154 + $0x308] sm:$0xff]
        %v263 = vld [vmem:[%s154 + $0x310] sm:$0xff]
        %v264 = vld [vmem:[%s154 + $0x318] sm:$0xff]
        %v265 = vld [vmem:[%s154 + $0x320] sm:$0xff]
        %v266 = vld [vmem:[%s154 + $0x328] sm:$0xff]
        %v267 = vld [vmem:[%s154 + $0x330] sm:$0xff]
        %v268 = vld [vmem:[%s154 + $0x338] sm:$0xff]
        %v269 = vld [vmem:[%s154 + $0x340] sm:$0xff]
        %v270 = vld [vmem:[%s154 + $0x348] sm:$0xff]
        %v271 = vld [vmem:[%s154 + $0x350] sm:$0xff]
        %v272 = vld [vmem:[%s154 + $0x358] sm:$0xff]
        %v273 = vld [vmem:[%s154 + $0x360] sm:$0xff]
        %v274 = vld [vmem:[%s154 + $0x368] sm:$0xff]
        %v275 = vld [vmem:[%s154 + $0x370] sm:$0xff]
        %v276 = vld [vmem:[%s154 + $0x378] sm:$0xff]
        %v277 = vld [vmem:[%s154 + $0x380] sm:$0xff]
        %v278 = vld [vmem:[%s154 + $0x388] sm:$0xff]
        %v279 = vld [vmem:[%s154 + $0x390] sm:$0xff]
        %v280 = vld [vmem:[%s154 + $0x398] sm:$0xff]
        %v281 = vld [vmem:[%s154 + $0x3a0] sm:$0xff]
        %v282 = vld [vmem:[%s154 + $0x3a8] sm:$0xff]
        %v283 = vld [vmem:[%s154 + $0x3b0] sm:$0xff]
        %v284 = vld [vmem:[%s154 + $0x3b8] sm:$0xff]
        %v285 = vld [vmem:[%s154 + $0x3c0] sm:$0xff]
        %v286 = vld [vmem:[%s154 + $0x3c8] sm:$0xff]
        %v287 = vld [vmem:[%s154 + $0x3d0] sm:$0xff]
        %v288 = vld [vmem:[%s154 + $0x3d8] sm:$0xff]
        %v289 = vld [vmem:[%s154 + $0x3e0] sm:$0xff]
        %v290 = vld [vmem:[%s154 + $0x3e8] sm:$0xff]
        %v291 = vld [vmem:[%s154 + $0x3f0] sm:$0xff]
        %v292 = vld [vmem:[%s154 + $0x3f8] sm:$0xff]
        %v293 = vld [vmem:[%s154 + $0x400] sm:$0xff]
        %v294 = vld [vmem:[%s154 + $0x408] sm:$0xff]
        %v295 = vld [vmem:[%s154 + $0x410] sm:$0xff]
        %v296 = vld [vmem:[%s154 + $0x418] sm:$0xff]
        %v297 = vld [vmem:[%s154 + $0x420] sm:$0xff]
        %v298 = vld [vmem:[%s154 + $0x428] sm:$0xff]
        %v299 = vld [vmem:[%s154 + $0x430] sm:$0xff]
        %v300 = vld [vmem:[%s154 + $0x438] sm:$0xff]
        %v301 = vld [vmem:[%s154 + $0x440] sm:$0xff]
        %v302 = vld [vmem:[%s154 + $0x448] sm:$0xff]
        %v303 = vld [vmem:[%s154 + $0x450] sm:$0xff]
        %v304 = vld [vmem:[%s154 + $0x458] sm:$0xff]
        %v305 = vld [vmem:[%s154 + $0x460] sm:$0xff]
        %v306 = vld [vmem:[%s154 + $0x468] sm:$0xff]
        %v307 = vld [vmem:[%s154 + $0x470] sm:$0xff]
        %v308 = vld [vmem:[%s154 + $0x478] sm:$0xff]
        %v309 = vld [vmem:[%s154 + $0x480] sm:$0xff]
        %v310 = vld [vmem:[%s154 + $0x488] sm:$0xff]
        %v311 = vld [vmem:[%s154 + $0x490] sm:$0xff]
        %v312 = vld [vmem:[%s154 + $0x498] sm:$0xff]
        %v313 = vld [vmem:[%s154 + $0x4a0] sm:$0xff]
        %v314 = vld [vmem:[%s154 + $0x4a8] sm:$0xff]
        %v315 = vld [vmem:[%s154 + $0x4b0] sm:$0xff]
        %v316 = vld [vmem:[%s154 + $0x4b8] sm:$0xff]
        %v317 = vld [vmem:[%s154 + $0x4c0] sm:$0xff]
        %v318 = vld [vmem:[%s154 + $0x4c8] sm:$0xff]
        %v319 = vld [vmem:[%s154 + $0x4d0] sm:$0xff]
        %v320 = vld [vmem:[%s154 + $0x4d8] sm:$0xff]
        %v321 = vld [vmem:[%s154 + $0x4e0] sm:$0xff]
        %v322 = vld [vmem:[%s154 + $0x4e8] sm:$0xff]
        %v323 = vld [vmem:[%s154 + $0x4f0] sm:$0xff]
        %v324 = vld [vmem:[%s154 + $0x4f8] sm:$0xff]
        %v325 = vld [vmem:[%s154 + $0x500] sm:$0xff]
        %v326 = vld [vmem:[%s154 + $0x508] sm:$0xff]
        %v327 = vld [vmem:[%s154 + $0x510] sm:$0xff]
        %v328 = vld [vmem:[%s154 + $0x518] sm:$0xff]
        %v329 = vld [vmem:[%s154 + $0x520] sm:$0xff]
        %v330 = vld [vmem:[%s154 + $0x528] sm:$0xff]
        %v331 = vld [vmem:[%s154 + $0x530] sm:$0xff]
        %v332 = vld [vmem:[%s154 + $0x538] sm:$0xff]
        %v333 = vld [vmem:[%s154 + $0x540] sm:$0xff]
        %v334 = vld [vmem:[%s154 + $0x548] sm:$0xff]
        %v335 = vld [vmem:[%s154 + $0x550] sm:$0xff]
        %v336 = vld [vmem:[%s154 + $0x558] sm:$0xff]
        %v337 = vld [vmem:[%s154 + $0x560] sm:$0xff]
        %v338 = vld [vmem:[%s154 + $0x568] sm:$0xff]
        %v339 = vld [vmem:[%s154 + $0x570] sm:$0xff]
        %v340 = vld [vmem:[%s154 + $0x578] sm:$0xff]
        %v341 = vld [vmem:[%s154 + $0x580] sm:$0xff]
        %v342 = vld [vmem:[%s154 + $0x588] sm:$0xff]
        %v343 = vld [vmem:[%s154 + $0x590] sm:$0xff]
        %v344 = vld [vmem:[%s154 + $0x598] sm:$0xff]
        %v345 = vld [vmem:[%s154 + $0x5a0] sm:$0xff]
        %v346 = vld [vmem:[%s154 + $0x5a8] sm:$0xff]
        %v347 = vld [vmem:[%s154 + $0x5b0] sm:$0xff]
        %v348 = vld [vmem:[%s154 + $0x5b8] sm:$0xff]
        %v349 = vld [vmem:[%s154 + $0x5c0] sm:$0xff]
        %v350 = vld [vmem:[%s154 + $0x5c8] sm:$0xff]
        %v351 = vld [vmem:[%s154 + $0x5d0] sm:$0xff]
        %v352 = vld [vmem:[%s154 + $0x5d8] sm:$0xff]
        %v353 = vld [vmem:[%s154 + $0x5e0] sm:$0xff]
        %v354 = vld [vmem:[%s154 + $0x5e8] sm:$0xff]
        %v355 = vld [vmem:[%s154 + $0x5f0] sm:$0xff]
        %v356 = vld [vmem:[%s154 + $0x5f8] sm:$0xff]
        %v357 = vld [vmem:[%s154 + $0x600] sm:$0xff]
        %v358 = vld [vmem:[%s154 + $0x608] sm:$0xff]
        %v359 = vld [vmem:[%s154 + $0x610] sm:$0xff]
        %v360 = vld [vmem:[%s154 + $0x618] sm:$0xff]
        %v361 = vld [vmem:[%s154 + $0x620] sm:$0xff]
        %v362 = vld [vmem:[%s154 + $0x628] sm:$0xff]
        %v363 = vld [vmem:[%s154 + $0x630] sm:$0xff]
        %v364 = vld [vmem:[%s154 + $0x638] sm:$0xff]
        %v365 = vld [vmem:[%s154 + $0x640] sm:$0xff]
        %v366 = vld [vmem:[%s154 + $0x648] sm:$0xff]
        %v367 = vld [vmem:[%s154 + $0x650] sm:$0xff]
        %v368 = vld [vmem:[%s154 + $0x658] sm:$0xff]
        %v369 = vld [vmem:[%s154 + $0x660] sm:$0xff]
        %v370 = vld [vmem:[%s154 + $0x668] sm:$0xff]
        %v371 = vld [vmem:[%s154 + $0x670] sm:$0xff]
        %v372 = vld [vmem:[%s154 + $0x678] sm:$0xff]
        %v373 = vld [vmem:[%s154 + $0x680] sm:$0xff]
        %v374 = vld [vmem:[%s154 + $0x688] sm:$0xff]
        %v375 = vld [vmem:[%s154 + $0x690] sm:$0xff]
        %v376 = vld [vmem:[%s154 + $0x698] sm:$0xff]
        %v377 = vld [vmem:[%s154 + $0x6a0] sm:$0xff]
        %v378 = vld [vmem:[%s154 + $0x6a8] sm:$0xff]
        %v379 = vld [vmem:[%s154 + $0x6b0] sm:$0xff]
        %v380 = vld [vmem:[%s154 + $0x6b8] sm:$0xff]
        %v381 = vld [vmem:[%s154 + $0x6c0] sm:$0xff]
        %v382 = vld [vmem:[%s154 + $0x6c8] sm:$0xff]
        %v383 = vld [vmem:[%s154 + $0x6d0] sm:$0xff]
        %v384 = vld [vmem:[%s154 + $0x6d8] sm:$0xff]
        %v385 = vld [vmem:[%s154 + $0x6e0] sm:$0xff]
        %v386 = vld [vmem:[%s154 + $0x6e8] sm:$0xff]
        %v387 = vld [vmem:[%s154 + $0x6f0] sm:$0xff]
        %v388 = vld [vmem:[%s154 + $0x6f8] sm:$0xff]
        %v389 = vld [vmem:[%s154 + $0x700] sm:$0xff]
        %v390 = vld [vmem:[%s154 + $0x708] sm:$0xff]
        %v391 = vld [vmem:[%s154 + $0x710] sm:$0xff]
        %v392 = vld [vmem:[%s154 + $0x718] sm:$0xff]
        %v393 = vld [vmem:[%s154 + $0x720] sm:$0xff]
        %v394 = vld [vmem:[%s154 + $0x728] sm:$0xff]
        %v395 = vld [vmem:[%s154 + $0x730] sm:$0xff]
        %v396 = vld [vmem:[%s154 + $0x738] sm:$0xff]
        %v397 = vld [vmem:[%s154 + $0x740] sm:$0xff]
        %v398 = vld [vmem:[%s154 + $0x748] sm:$0xff]
        %v399 = vld [vmem:[%s154 + $0x750] sm:$0xff]
        %v400 = vld [vmem:[%s154 + $0x758] sm:$0xff]
        %v401 = vld [vmem:[%s154 + $0x760] sm:$0xff]
        %v402 = vld [vmem:[%s154 + $0x768] sm:$0xff]
        %v403 = vld [vmem:[%s154 + $0x770] sm:$0xff]
        %v404 = vld [vmem:[%s154 + $0x778] sm:$0xff]
        %v405 = vld [vmem:[%s154 + $0x780] sm:$0xff]
        %v406 = vld [vmem:[%s154 + $0x788] sm:$0xff]
        %v407 = vld [vmem:[%s154 + $0x790] sm:$0xff]
        %v408 = vld [vmem:[%s154 + $0x798] sm:$0xff]
        %v409 = vld [vmem:[%s154 + $0x7a0] sm:$0xff]
        %v410 = vld [vmem:[%s154 + $0x7a8] sm:$0xff]
        %v411 = vld [vmem:[%s154 + $0x7b0] sm:$0xff]
        %v412 = vld [vmem:[%s154 + $0x7b8] sm:$0xff]
        %v413 = vld [vmem:[%s154 + $0x7c0] sm:$0xff]
        %v414 = vld [vmem:[%s154 + $0x7c8] sm:$0xff]
        %v415 = vld [vmem:[%s154 + $0x7d0] sm:$0xff]
        %v416 = vld [vmem:[%s154 + $0x7d8] sm:$0xff]
        %v417 = vld [vmem:[%s154 + $0x7e0] sm:$0xff]
        %v418 = vld [vmem:[%s154 + $0x7e8] sm:$0xff]
        %v419 = vld [vmem:[%s154 + $0x7f0] sm:$0xff]
        %v420 = vld [vmem:[%s154 + $0x7f8] sm:$0xff]
        %v421 = vld [vmem:[%s154 + $0x800] sm:$0xff]
        %v422 = vld [vmem:[%s1] sm:$0x3f]
        %vm423 = vcmask 48128
        %v425 = vsel %vm423, %v165, 0
        %v428 = vsel %vm423, %v166, 0
        %v431 = vsel %vm423, %v167, 0
        %v434 = vsel %vm423, %v168, 0
        %v437 = vsel %vm423, %v169, 0
        %v440 = vsel %vm423, %v170, 0
        %v443 = vsel %vm423, %v171, 0
        %v446 = vsel %vm423, %v172, 0
        %v449 = vsel %vm423, %v173, 0
        %v452 = vsel %vm423, %v174, 0
        %v455 = vsel %vm423, %v175, 0
        %v458 = vsel %vm423, %v176, 0
        %v461 = vsel %vm423, %v177, 0
        %v464 = vsel %vm423, %v178, 0
        %v467 = vsel %vm423, %v179, 0
        %v470 = vsel %vm423, %v180, 0
        %v473 = vsel %vm423, %v181, 0
        %v476 = vsel %vm423, %v182, 0
        %v479 = vsel %vm423, %v183, 0
        %v482 = vsel %vm423, %v184, 0
        %v485 = vsel %vm423, %v185, 0
        %v488 = vsel %vm423, %v186, 0
        %v491 = vsel %vm423, %v187, 0
        %v494 = vsel %vm423, %v188, 0
        %v497 = vsel %vm423, %v189, 0
        %v500 = vsel %vm423, %v190, 0
        %v503 = vsel %vm423, %v191, 0
        %v506 = vsel %vm423, %v192, 0
        %v509 = vsel %vm423, %v193, 0
        %v512 = vsel %vm423, %v194, 0
        %v515 = vsel %vm423, %v195, 0
        %v518 = vsel %vm423, %v196, 0
        %v521 = vsel %vm423, %v197, 0
        %v524 = vsel %vm423, %v198, 0
        %v527 = vsel %vm423, %v199, 0
        %v530 = vsel %vm423, %v200, 0
        %v533 = vsel %vm423, %v201, 0
        %v536 = vsel %vm423, %v202, 0
        %v539 = vsel %vm423, %v203, 0
        %v542 = vsel %vm423, %v204, 0
        %v545 = vsel %vm423, %v205, 0
        %v548 = vsel %vm423, %v206, 0
        %v551 = vsel %vm423, %v207, 0
        %v554 = vsel %vm423, %v208, 0
        %v557 = vsel %vm423, %v209, 0
        %v560 = vsel %vm423, %v210, 0
        %v563 = vsel %vm423, %v211, 0
        %v566 = vsel %vm423, %v212, 0
        %v569 = vsel %vm423, %v213, 0
        %v572 = vsel %vm423, %v214, 0
        %v575 = vsel %vm423, %v215, 0
        %v578 = vsel %vm423, %v216, 0
        %v581 = vsel %vm423, %v217, 0
        %v584 = vsel %vm423, %v218, 0
        %v587 = vsel %vm423, %v219, 0
        %v590 = vsel %vm423, %v220, 0
        %v593 = vsel %vm423, %v221, 0
        %v596 = vsel %vm423, %v222, 0
        %v599 = vsel %vm423, %v223, 0
        %v602 = vsel %vm423, %v224, 0
        %v605 = vsel %vm423, %v225, 0
        %v608 = vsel %vm423, %v226, 0
        %v611 = vsel %vm423, %v227, 0
        %v614 = vsel %vm423, %v228, 0
        %v617 = vsel %vm423, %v229, 0
        %v620 = vsel %vm423, %v230, 0
        %v623 = vsel %vm423, %v231, 0
        %v626 = vsel %vm423, %v232, 0
        %v629 = vsel %vm423, %v233, 0
        %v632 = vsel %vm423, %v234, 0
        %v635 = vsel %vm423, %v235, 0
        %v638 = vsel %vm423, %v236, 0
        %v641 = vsel %vm423, %v237, 0
        %v644 = vsel %vm423, %v238, 0
        %v647 = vsel %vm423, %v239, 0
        %v650 = vsel %vm423, %v240, 0
        %v653 = vsel %vm423, %v241, 0
        %v656 = vsel %vm423, %v242, 0
        %v659 = vsel %vm423, %v243, 0
        %v662 = vsel %vm423, %v244, 0
        %v665 = vsel %vm423, %v245, 0
        %v668 = vsel %vm423, %v246, 0
        %v671 = vsel %vm423, %v247, 0
        %v674 = vsel %vm423, %v248, 0
        %v677 = vsel %vm423, %v249, 0
        %v680 = vsel %vm423, %v250, 0
        %v683 = vsel %vm423, %v251, 0
        %v686 = vsel %vm423, %v252, 0
        %v689 = vsel %vm423, %v253, 0
        %v692 = vsel %vm423, %v254, 0
        %v695 = vsel %vm423, %v255, 0
        %v698 = vsel %vm423, %v256, 0
        %v701 = vsel %vm423, %v257, 0
        %v704 = vsel %vm423, %v258, 0
        %v707 = vsel %vm423, %v259, 0
        %v710 = vsel %vm423, %v260, 0
        %v713 = vsel %vm423, %v261, 0
        %v716 = vsel %vm423, %v262, 0
        %v719 = vsel %vm423, %v263, 0
        %v722 = vsel %vm423, %v264, 0
        %v725 = vsel %vm423, %v265, 0
        %v728 = vsel %vm423, %v266, 0
        %v731 = vsel %vm423, %v267, 0
        %v734 = vsel %vm423, %v268, 0
        %v737 = vsel %vm423, %v269, 0
        %v740 = vsel %vm423, %v270, 0
        %v743 = vsel %vm423, %v271, 0
        %v746 = vsel %vm423, %v272, 0
        %v749 = vsel %vm423, %v273, 0
        %v752 = vsel %vm423, %v274, 0
        %v755 = vsel %vm423, %v275, 0
        %v758 = vsel %vm423, %v276, 0
        %v761 = vsel %vm423, %v277, 0
        %v764 = vsel %vm423, %v278, 0
        %v767 = vsel %vm423, %v279, 0
        %v770 = vsel %vm423, %v280, 0
        %v773 = vsel %vm423, %v281, 0
        %v776 = vsel %vm423, %v282, 0
        %v779 = vsel %vm423, %v283, 0
        %v782 = vsel %vm423, %v284, 0
        %v785 = vsel %vm423, %v285, 0
        %v788 = vsel %vm423, %v286, 0
        %v791 = vsel %vm423, %v287, 0
        %v794 = vsel %vm423, %v288, 0
        %v797 = vsel %vm423, %v289, 0
        %v800 = vsel %vm423, %v290, 0
        %v803 = vsel %vm423, %v291, 0
        %v806 = vsel %vm423, %v292, 0
        %v809 = vsel %vm423, %v293, 0
        %v812 = vsel %vm423, %v294, 0
        %v815 = vsel %vm423, %v295, 0
        %v818 = vsel %vm423, %v296, 0
        %v821 = vsel %vm423, %v297, 0
        %v824 = vsel %vm423, %v298, 0
        %v827 = vsel %vm423, %v299, 0
        %v830 = vsel %vm423, %v300, 0
        %v833 = vsel %vm423, %v301, 0
        %v836 = vsel %vm423, %v302, 0
        %v839 = vsel %vm423, %v303, 0
        %v842 = vsel %vm423, %v304, 0
        %v845 = vsel %vm423, %v305, 0
        %v848 = vsel %vm423, %v306, 0
        %v851 = vsel %vm423, %v307, 0
        %v854 = vsel %vm423, %v308, 0
        %v857 = vsel %vm423, %v309, 0
        %v860 = vsel %vm423, %v310, 0
        %v863 = vsel %vm423, %v311, 0
        %v866 = vsel %vm423, %v312, 0
        %v869 = vsel %vm423, %v313, 0
        %v872 = vsel %vm423, %v314, 0
        %v875 = vsel %vm423, %v315, 0
        %v878 = vsel %vm423, %v316, 0
        %v881 = vsel %vm423, %v317, 0
        %v884 = vsel %vm423, %v318, 0
        %v887 = vsel %vm423, %v319, 0
        %v890 = vsel %vm423, %v320, 0
        %v893 = vsel %vm423, %v321, 0
        %v896 = vsel %vm423, %v322, 0
        %v899 = vsel %vm423, %v323, 0
        %v902 = vsel %vm423, %v324, 0
        %v905 = vsel %vm423, %v325, 0
        %v908 = vsel %vm423, %v326, 0
        %v911 = vsel %vm423, %v327, 0
        %v914 = vsel %vm423, %v328, 0
        %v917 = vsel %vm423, %v329, 0
        %v920 = vsel %vm423, %v330, 0
        %v923 = vsel %vm423, %v331, 0
        %v926 = vsel %vm423, %v332, 0
        %v929 = vsel %vm423, %v333, 0
        %v932 = vsel %vm423, %v334, 0
        %v935 = vsel %vm423, %v335, 0
        %v938 = vsel %vm423, %v336, 0
        %v941 = vsel %vm423, %v337, 0
        %v944 = vsel %vm423, %v338, 0
        %v947 = vsel %vm423, %v339, 0
        %v950 = vsel %vm423, %v340, 0
        %v953 = vsel %vm423, %v341, 0
        %v956 = vsel %vm423, %v342, 0
        %v959 = vsel %vm423, %v343, 0
        %v962 = vsel %vm423, %v344, 0
        %v965 = vsel %vm423, %v345, 0
        %v968 = vsel %vm423, %v346, 0
        %v971 = vsel %vm423, %v347, 0
        %v974 = vsel %vm423, %v348, 0
        %v977 = vsel %vm423, %v349, 0
        %v980 = vsel %vm423, %v350, 0
        %v983 = vsel %vm423, %v351, 0
        %v986 = vsel %vm423, %v352, 0
        %v989 = vsel %vm423, %v353, 0
        %v992 = vsel %vm423, %v354, 0
        %v995 = vsel %vm423, %v355, 0
        %v998 = vsel %vm423, %v356, 0
        %v1001 = vsel %vm423, %v357, 0
        %v1004 = vsel %vm423, %v358, 0
        %v1007 = vsel %vm423, %v359, 0
        %v1010 = vsel %vm423, %v360, 0
        %v1013 = vsel %vm423, %v361, 0
        %v1016 = vsel %vm423, %v362, 0
        %v1019 = vsel %vm423, %v363, 0
        %v1022 = vsel %vm423, %v364, 0
        %v1025 = vsel %vm423, %v365, 0
        %v1028 = vsel %vm423, %v366, 0
        %v1031 = vsel %vm423, %v367, 0
        %v1034 = vsel %vm423, %v368, 0
        %v1037 = vsel %vm423, %v369, 0
        %v1040 = vsel %vm423, %v370, 0
        %v1043 = vsel %vm423, %v371, 0
        %v1046 = vsel %vm423, %v372, 0
        %v1049 = vsel %vm423, %v373, 0
        %v1052 = vsel %vm423, %v374, 0
        %v1055 = vsel %vm423, %v375, 0
        %v1058 = vsel %vm423, %v376, 0
        %v1061 = vsel %vm423, %v377, 0
        %v1064 = vsel %vm423, %v378, 0
        %v1067 = vsel %vm423, %v379, 0
        %v1070 = vsel %vm423, %v380, 0
        %v1073 = vsel %vm423, %v381, 0
        %v1076 = vsel %vm423, %v382, 0
        %v1079 = vsel %vm423, %v383, 0
        %v1082 = vsel %vm423, %v384, 0
        %v1085 = vsel %vm423, %v385, 0
        %v1088 = vsel %vm423, %v386, 0
        %v1091 = vsel %vm423, %v387, 0
        %v1094 = vsel %vm423, %v388, 0
        %v1097 = vsel %vm423, %v389, 0
        %v1100 = vsel %vm423, %v390, 0
        %v1103 = vsel %vm423, %v391, 0
        %v1106 = vsel %vm423, %v392, 0
        %v1109 = vsel %vm423, %v393, 0
        %v1112 = vsel %vm423, %v394, 0
        %v1115 = vsel %vm423, %v395, 0
        %v1118 = vsel %vm423, %v396, 0
        %v1121 = vsel %vm423, %v397, 0
        %v1124 = vsel %vm423, %v398, 0
        %v1127 = vsel %vm423, %v399, 0
        %v1130 = vsel %vm423, %v400, 0
        %v1133 = vsel %vm423, %v401, 0
        %v1136 = vsel %vm423, %v402, 0
        %v1139 = vsel %vm423, %v403, 0
        %v1142 = vsel %vm423, %v404, 0
        %v1145 = vsel %vm423, %v405, 0
        %v1148 = vsel %vm423, %v406, 0
        %v1151 = vsel %vm423, %v407, 0
        %v1154 = vsel %vm423, %v408, 0
        %v1157 = vsel %vm423, %v409, 0
        %v1160 = vsel %vm423, %v410, 0
        %v1163 = vsel %vm423, %v411, 0
        %v1166 = vsel %vm423, %v412, 0
        %v1169 = vsel %vm423, %v413, 0
        %v1172 = vsel %vm423, %v414, 0
        %v1175 = vsel %vm423, %v415, 0
        %v1178 = vsel %vm423, %v416, 0
        %v1181 = vsel %vm423, %v417, 0
        %v1184 = vsel %vm423, %v418, 0
        %v1187 = vsel %vm423, %v419, 0
        %v1190 = vsel %vm423, %v420, 0
        %v1193 = vsel %vm423, %v421, 0
        %vm1195 = vcmask 1045504
        %v1197 = vsel %vm1195, %v422, 0
        %1199 = vmatpush.msra.mxu0 0.0
        %1200 = vmatpush.msra.mxu0 0.0
        %1201 = vmatpush.msra.mxu0 0.0
        %1202 = vmatpush.msra.mxu0 0.0
        %1203 = vmatpush.msra.mxu0 0.0
        %1204 = vmatpush.msra.mxu0 0.0
        %1205 = vmatpush.msra.mxu0 0.0
        %1206 = vmatpush.msra.mxu0 0.0
        %1207 = vmatpush.msra.mxu0 0.0
        %1208 = vmatpush.msra.mxu0 0.0
        %1209 = vmatpush.msra.mxu0 0.0
        %1210 = vmatpush.msra.mxu0 0.0
        %1211 = vmatpush.msra.mxu0 0.0
        %1212 = vmatpush.msra.mxu0 0.0
        %1213 = vmatpush.msra.mxu0 0.0
        %1214 = vmatpush.msra.mxu0 %v1197
        %1215 = vmatmul.f32.gmra.mxu0 %v425
        %v1216 = vpop.f32.mrf.mxu0
        %v1217 = vadd.f32 0.0, %v1216
        %1218 = vmatmul.f32.gmra.mxu0 %v428
        %v1219 = vpop.f32.mrf.mxu0
        %v1220 = vadd.f32 0.0, %v1219
        %1221 = vmatmul.f32.gmra.mxu0 %v431
        %v1222 = vpop.f32.mrf.mxu0
        %v1223 = vadd.f32 0.0, %v1222
        %1224 = vmatmul.f32.gmra.mxu0 %v434
        %v1225 = vpop.f32.mrf.mxu0
        %v1226 = vadd.f32 0.0, %v1225
        %1227 = vmatmul.f32.gmra.mxu0 %v437
        %v1228 = vpop.f32.mrf.mxu0
        %v1229 = vadd.f32 0.0, %v1228
        %1230 = vmatmul.f32.gmra.mxu0 %v440
        %v1231 = vpop.f32.mrf.mxu0
        %v1232 = vadd.f32 0.0, %v1231
        %1233 = vmatmul.f32.gmra.mxu0 %v443
        %v1234 = vpop.f32.mrf.mxu0
        %v1235 = vadd.f32 0.0, %v1234
        %1236 = vmatmul.f32.gmra.mxu0 %v446
        %v1237 = vpop.f32.mrf.mxu0
        %v1238 = vadd.f32 0.0, %v1237
        %1239 = vmatmul.f32.gmra.mxu0 %v449
        %v1240 = vpop.f32.mrf.mxu0
        %v1241 = vadd.f32 0.0, %v1240
        %1242 = vmatmul.f32.gmra.mxu0 %v452
        %v1243 = vpop.f32.mrf.mxu0
        %v1244 = vadd.f32 0.0, %v1243
        %1245 = vmatmul.f32.gmra.mxu0 %v455
        %v1246 = vpop.f32.mrf.mxu0
        %v1247 = vadd.f32 0.0, %v1246
        %1248 = vmatmul.f32.gmra.mxu0 %v458
        %v1249 = vpop.f32.mrf.mxu0
        %v1250 = vadd.f32 0.0, %v1249
        %1251 = vmatmul.f32.gmra.mxu0 %v461
        %v1252 = vpop.f32.mrf.mxu0
        %v1253 = vadd.f32 0.0, %v1252
        %1254 = vmatmul.f32.gmra.mxu0 %v464
        %v1255 = vpop.f32.mrf.mxu0
        %v1256 = vadd.f32 0.0, %v1255
        %1257 = vmatmul.f32.gmra.mxu0 %v467
        %v1258 = vpop.f32.mrf.mxu0
        %v1259 = vadd.f32 0.0, %v1258
        %1260 = vmatmul.f32.gmra.mxu0 %v470
        %v1261 = vpop.f32.mrf.mxu0
        %v1262 = vadd.f32 0.0, %v1261
        %1263 = vmatmul.f32.gmra.mxu0 %v473
        %v1264 = vpop.f32.mrf.mxu0
        %v1265 = vadd.f32 0.0, %v1264
        %1266 = vmatmul.f32.gmra.mxu0 %v476
        %v1267 = vpop.f32.mrf.mxu0
        %v1268 = vadd.f32 0.0, %v1267
        %1269 = vmatmul.f32.gmra.mxu0 %v479
        %v1270 = vpop.f32.mrf.mxu0
        %v1271 = vadd.f32 0.0, %v1270
        %1272 = vmatmul.f32.gmra.mxu0 %v482
        %v1273 = vpop.f32.mrf.mxu0
        %v1274 = vadd.f32 0.0, %v1273
        %1275 = vmatmul.f32.gmra.mxu0 %v485
        %v1276 = vpop.f32.mrf.mxu0
        %v1277 = vadd.f32 0.0, %v1276
        %1278 = vmatmul.f32.gmra.mxu0 %v488
        %v1279 = vpop.f32.mrf.mxu0
        %v1280 = vadd.f32 0.0, %v1279
        %1281 = vmatmul.f32.gmra.mxu0 %v491
        %v1282 = vpop.f32.mrf.mxu0
        %v1283 = vadd.f32 0.0, %v1282
        %1284 = vmatmul.f32.gmra.mxu0 %v494
        %v1285 = vpop.f32.mrf.mxu0
        %v1286 = vadd.f32 0.0, %v1285
        %1287 = vmatmul.f32.gmra.mxu0 %v497
        %v1288 = vpop.f32.mrf.mxu0
        %v1289 = vadd.f32 0.0, %v1288
        %1290 = vmatmul.f32.gmra.mxu0 %v500
        %v1291 = vpop.f32.mrf.mxu0
        %v1292 = vadd.f32 0.0, %v1291
        %1293 = vmatmul.f32.gmra.mxu0 %v503
        %v1294 = vpop.f32.mrf.mxu0
        %v1295 = vadd.f32 0.0, %v1294
        %1296 = vmatmul.f32.gmra.mxu0 %v506
        %v1297 = vpop.f32.mrf.mxu0
        %v1298 = vadd.f32 0.0, %v1297
        %1299 = vmatmul.f32.gmra.mxu0 %v509
        %v1300 = vpop.f32.mrf.mxu0
        %v1301 = vadd.f32 0.0, %v1300
        %1302 = vmatmul.f32.gmra.mxu0 %v512
        %v1303 = vpop.f32.mrf.mxu0
        %v1304 = vadd.f32 0.0, %v1303
        %1305 = vmatmul.f32.gmra.mxu0 %v515
        %v1306 = vpop.f32.mrf.mxu0
        %v1307 = vadd.f32 0.0, %v1306
        %1308 = vmatmul.f32.gmra.mxu0 %v518
        %v1309 = vpop.f32.mrf.mxu0
        %v1310 = vadd.f32 0.0, %v1309
        %1311 = vmatmul.f32.gmra.mxu0 %v521
        %v1312 = vpop.f32.mrf.mxu0
        %v1313 = vadd.f32 0.0, %v1312
        %1314 = vmatmul.f32.gmra.mxu0 %v524
        %v1315 = vpop.f32.mrf.mxu0
        %v1316 = vadd.f32 0.0, %v1315
        %1317 = vmatmul.f32.gmra.mxu0 %v527
        %v1318 = vpop.f32.mrf.mxu0
        %v1319 = vadd.f32 0.0, %v1318
        %1320 = vmatmul.f32.gmra.mxu0 %v530
        %v1321 = vpop.f32.mrf.mxu0
        %v1322 = vadd.f32 0.0, %v1321
        %1323 = vmatmul.f32.gmra.mxu0 %v533
        %v1324 = vpop.f32.mrf.mxu0
        %v1325 = vadd.f32 0.0, %v1324
        %1326 = vmatmul.f32.gmra.mxu0 %v536
        %v1327 = vpop.f32.mrf.mxu0
        %v1328 = vadd.f32 0.0, %v1327
        %1329 = vmatmul.f32.gmra.mxu0 %v539
        %v1330 = vpop.f32.mrf.mxu0
        %v1331 = vadd.f32 0.0, %v1330
        %1332 = vmatmul.f32.gmra.mxu0 %v542
        %v1333 = vpop.f32.mrf.mxu0
        %v1334 = vadd.f32 0.0, %v1333
        %1335 = vmatmul.f32.gmra.mxu0 %v545
        %v1336 = vpop.f32.mrf.mxu0
        %v1337 = vadd.f32 0.0, %v1336
        %1338 = vmatmul.f32.gmra.mxu0 %v548
        %v1339 = vpop.f32.mrf.mxu0
        %v1340 = vadd.f32 0.0, %v1339
        %1341 = vmatmul.f32.gmra.mxu0 %v551
        %v1342 = vpop.f32.mrf.mxu0
        %v1343 = vadd.f32 0.0, %v1342
        %1344 = vmatmul.f32.gmra.mxu0 %v554
        %v1345 = vpop.f32.mrf.mxu0
        %v1346 = vadd.f32 0.0, %v1345
        %1347 = vmatmul.f32.gmra.mxu0 %v557
        %v1348 = vpop.f32.mrf.mxu0
        %v1349 = vadd.f32 0.0, %v1348
        %1350 = vmatmul.f32.gmra.mxu0 %v560
        %v1351 = vpop.f32.mrf.mxu0
        %v1352 = vadd.f32 0.0, %v1351
        %1353 = vmatmul.f32.gmra.mxu0 %v563
        %v1354 = vpop.f32.mrf.mxu0
        %v1355 = vadd.f32 0.0, %v1354
        %1356 = vmatmul.f32.gmra.mxu0 %v566
        %v1357 = vpop.f32.mrf.mxu0
        %v1358 = vadd.f32 0.0, %v1357
        %1359 = vmatmul.f32.gmra.mxu0 %v569
        %v1360 = vpop.f32.mrf.mxu0
        %v1361 = vadd.f32 0.0, %v1360
        %1362 = vmatmul.f32.gmra.mxu0 %v572
        %v1363 = vpop.f32.mrf.mxu0
        %v1364 = vadd.f32 0.0, %v1363
        %1365 = vmatmul.f32.gmra.mxu0 %v575
        %v1366 = vpop.f32.mrf.mxu0
        %v1367 = vadd.f32 0.0, %v1366
        %1368 = vmatmul.f32.gmra.mxu0 %v578
        %v1369 = vpop.f32.mrf.mxu0
        %v1370 = vadd.f32 0.0, %v1369
        %1371 = vmatmul.f32.gmra.mxu0 %v581
        %v1372 = vpop.f32.mrf.mxu0
        %v1373 = vadd.f32 0.0, %v1372
        %1374 = vmatmul.f32.gmra.mxu0 %v584
        %v1375 = vpop.f32.mrf.mxu0
        %v1376 = vadd.f32 0.0, %v1375
        %1377 = vmatmul.f32.gmra.mxu0 %v587
        %v1378 = vpop.f32.mrf.mxu0
        %v1379 = vadd.f32 0.0, %v1378
        %1380 = vmatmul.f32.gmra.mxu0 %v590
        %v1381 = vpop.f32.mrf.mxu0
        %v1382 = vadd.f32 0.0, %v1381
        %1383 = vmatmul.f32.gmra.mxu0 %v593
        %v1384 = vpop.f32.mrf.mxu0
        %v1385 = vadd.f32 0.0, %v1384
        %1386 = vmatmul.f32.gmra.mxu0 %v596
        %v1387 = vpop.f32.mrf.mxu0
        %v1388 = vadd.f32 0.0, %v1387
        %1389 = vmatmul.f32.gmra.mxu0 %v599
        %v1390 = vpop.f32.mrf.mxu0
        %v1391 = vadd.f32 0.0, %v1390
        %1392 = vmatmul.f32.gmra.mxu0 %v602
        %v1393 = vpop.f32.mrf.mxu0
        %v1394 = vadd.f32 0.0, %v1393
        %1395 = vmatmul.f32.gmra.mxu0 %v605
        %v1396 = vpop.f32.mrf.mxu0
        %v1397 = vadd.f32 0.0, %v1396
        %1398 = vmatmul.f32.gmra.mxu0 %v608
        %v1399 = vpop.f32.mrf.mxu0
        %v1400 = vadd.f32 0.0, %v1399
        %1401 = vmatmul.f32.gmra.mxu0 %v611
        %v1402 = vpop.f32.mrf.mxu0
        %v1403 = vadd.f32 0.0, %v1402
        %1404 = vmatmul.f32.gmra.mxu0 %v614
        %v1405 = vpop.f32.mrf.mxu0
        %v1406 = vadd.f32 0.0, %v1405
        %1407 = vmatmul.f32.gmra.mxu0 %v617
        %v1408 = vpop.f32.mrf.mxu0
        %v1409 = vadd.f32 0.0, %v1408
        %1410 = vmatmul.f32.gmra.mxu0 %v620
        %v1411 = vpop.f32.mrf.mxu0
        %v1412 = vadd.f32 0.0, %v1411
        %1413 = vmatmul.f32.gmra.mxu0 %v623
        %v1414 = vpop.f32.mrf.mxu0
        %v1415 = vadd.f32 0.0, %v1414
        %1416 = vmatmul.f32.gmra.mxu0 %v626
        %v1417 = vpop.f32.mrf.mxu0
        %v1418 = vadd.f32 0.0, %v1417
        %1419 = vmatmul.f32.gmra.mxu0 %v629
        %v1420 = vpop.f32.mrf.mxu0
        %v1421 = vadd.f32 0.0, %v1420
        %1422 = vmatmul.f32.gmra.mxu0 %v632
        %v1423 = vpop.f32.mrf.mxu0
        %v1424 = vadd.f32 0.0, %v1423
        %1425 = vmatmul.f32.gmra.mxu0 %v635
        %v1426 = vpop.f32.mrf.mxu0
        %v1427 = vadd.f32 0.0, %v1426
        %1428 = vmatmul.f32.gmra.mxu0 %v638
        %v1429 = vpop.f32.mrf.mxu0
        %v1430 = vadd.f32 0.0, %v1429
        %1431 = vmatmul.f32.gmra.mxu0 %v641
        %v1432 = vpop.f32.mrf.mxu0
        %v1433 = vadd.f32 0.0, %v1432
        %1434 = vmatmul.f32.gmra.mxu0 %v644
        %v1435 = vpop.f32.mrf.mxu0
        %v1436 = vadd.f32 0.0, %v1435
        %1437 = vmatmul.f32.gmra.mxu0 %v647
        %v1438 = vpop.f32.mrf.mxu0
        %v1439 = vadd.f32 0.0, %v1438
        %1440 = vmatmul.f32.gmra.mxu0 %v650
        %v1441 = vpop.f32.mrf.mxu0
        %v1442 = vadd.f32 0.0, %v1441
        %1443 = vmatmul.f32.gmra.mxu0 %v653
        %v1444 = vpop.f32.mrf.mxu0
        %v1445 = vadd.f32 0.0, %v1444
        %1446 = vmatmul.f32.gmra.mxu0 %v656
        %v1447 = vpop.f32.mrf.mxu0
        %v1448 = vadd.f32 0.0, %v1447
        %1449 = vmatmul.f32.gmra.mxu0 %v659
        %v1450 = vpop.f32.mrf.mxu0
        %v1451 = vadd.f32 0.0, %v1450
        %1452 = vmatmul.f32.gmra.mxu0 %v662
        %v1453 = vpop.f32.mrf.mxu0
        %v1454 = vadd.f32 0.0, %v1453
        %1455 = vmatmul.f32.gmra.mxu0 %v665
        %v1456 = vpop.f32.mrf.mxu0
        %v1457 = vadd.f32 0.0, %v1456
        %1458 = vmatmul.f32.gmra.mxu0 %v668
        %v1459 = vpop.f32.mrf.mxu0
        %v1460 = vadd.f32 0.0, %v1459
        %1461 = vmatmul.f32.gmra.mxu0 %v671
        %v1462 = vpop.f32.mrf.mxu0
        %v1463 = vadd.f32 0.0, %v1462
        %1464 = vmatmul.f32.gmra.mxu0 %v674
        %v1465 = vpop.f32.mrf.mxu0
        %v1466 = vadd.f32 0.0, %v1465
        %1467 = vmatmul.f32.gmra.mxu0 %v677
        %v1468 = vpop.f32.mrf.mxu0
        %v1469 = vadd.f32 0.0, %v1468
        %1470 = vmatmul.f32.gmra.mxu0 %v680
        %v1471 = vpop.f32.mrf.mxu0
        %v1472 = vadd.f32 0.0, %v1471
        %1473 = vmatmul.f32.gmra.mxu0 %v683
        %v1474 = vpop.f32.mrf.mxu0
        %v1475 = vadd.f32 0.0, %v1474
        %1476 = vmatmul.f32.gmra.mxu0 %v686
        %v1477 = vpop.f32.mrf.mxu0
        %v1478 = vadd.f32 0.0, %v1477
        %1479 = vmatmul.f32.gmra.mxu0 %v689
        %v1480 = vpop.f32.mrf.mxu0
        %v1481 = vadd.f32 0.0, %v1480
        %1482 = vmatmul.f32.gmra.mxu0 %v692
        %v1483 = vpop.f32.mrf.mxu0
        %v1484 = vadd.f32 0.0, %v1483
        %1485 = vmatmul.f32.gmra.mxu0 %v695
        %v1486 = vpop.f32.mrf.mxu0
        %v1487 = vadd.f32 0.0, %v1486
        %1488 = vmatmul.f32.gmra.mxu0 %v698
        %v1489 = vpop.f32.mrf.mxu0
        %v1490 = vadd.f32 0.0, %v1489
        %1491 = vmatmul.f32.gmra.mxu0 %v701
        %v1492 = vpop.f32.mrf.mxu0
        %v1493 = vadd.f32 0.0, %v1492
        %1494 = vmatmul.f32.gmra.mxu0 %v704
        %v1495 = vpop.f32.mrf.mxu0
        %v1496 = vadd.f32 0.0, %v1495
        %1497 = vmatmul.f32.gmra.mxu0 %v707
        %v1498 = vpop.f32.mrf.mxu0
        %v1499 = vadd.f32 0.0, %v1498
        %1500 = vmatmul.f32.gmra.mxu0 %v710
        %v1501 = vpop.f32.mrf.mxu0
        %v1502 = vadd.f32 0.0, %v1501
        %1503 = vmatmul.f32.gmra.mxu0 %v713
        %v1504 = vpop.f32.mrf.mxu0
        %v1505 = vadd.f32 0.0, %v1504
        %1506 = vmatmul.f32.gmra.mxu0 %v716
        %v1507 = vpop.f32.mrf.mxu0
        %v1508 = vadd.f32 0.0, %v1507
        %1509 = vmatmul.f32.gmra.mxu0 %v719
        %v1510 = vpop.f32.mrf.mxu0
        %v1511 = vadd.f32 0.0, %v1510
        %1512 = vmatmul.f32.gmra.mxu0 %v722
        %v1513 = vpop.f32.mrf.mxu0
        %v1514 = vadd.f32 0.0, %v1513
        %1515 = vmatmul.f32.gmra.mxu0 %v725
        %v1516 = vpop.f32.mrf.mxu0
        %v1517 = vadd.f32 0.0, %v1516
        %1518 = vmatmul.f32.gmra.mxu0 %v728
        %v1519 = vpop.f32.mrf.mxu0
        %v1520 = vadd.f32 0.0, %v1519
        %1521 = vmatmul.f32.gmra.mxu0 %v731
        %v1522 = vpop.f32.mrf.mxu0
        %v1523 = vadd.f32 0.0, %v1522
        %1524 = vmatmul.f32.gmra.mxu0 %v734
        %v1525 = vpop.f32.mrf.mxu0
        %v1526 = vadd.f32 0.0, %v1525
        %1527 = vmatmul.f32.gmra.mxu0 %v737
        %v1528 = vpop.f32.mrf.mxu0
        %v1529 = vadd.f32 0.0, %v1528
        %1530 = vmatmul.f32.gmra.mxu0 %v740
        %v1531 = vpop.f32.mrf.mxu0
        %v1532 = vadd.f32 0.0, %v1531
        %1533 = vmatmul.f32.gmra.mxu0 %v743
        %v1534 = vpop.f32.mrf.mxu0
        %v1535 = vadd.f32 0.0, %v1534
        %1536 = vmatmul.f32.gmra.mxu0 %v746
        %v1537 = vpop.f32.mrf.mxu0
        %v1538 = vadd.f32 0.0, %v1537
        %1539 = vmatmul.f32.gmra.mxu0 %v749
        %v1540 = vpop.f32.mrf.mxu0
        %v1541 = vadd.f32 0.0, %v1540
        %1542 = vmatmul.f32.gmra.mxu0 %v752
        %v1543 = vpop.f32.mrf.mxu0
        %v1544 = vadd.f32 0.0, %v1543
        %1545 = vmatmul.f32.gmra.mxu0 %v755
        %v1546 = vpop.f32.mrf.mxu0
        %v1547 = vadd.f32 0.0, %v1546
        %1548 = vmatmul.f32.gmra.mxu0 %v758
        %v1549 = vpop.f32.mrf.mxu0
        %v1550 = vadd.f32 0.0, %v1549
        %1551 = vmatmul.f32.gmra.mxu0 %v761
        %v1552 = vpop.f32.mrf.mxu0
        %v1553 = vadd.f32 0.0, %v1552
        %1554 = vmatmul.f32.gmra.mxu0 %v764
        %v1555 = vpop.f32.mrf.mxu0
        %v1556 = vadd.f32 0.0, %v1555
        %1557 = vmatmul.f32.gmra.mxu0 %v767
        %v1558 = vpop.f32.mrf.mxu0
        %v1559 = vadd.f32 0.0, %v1558
        %1560 = vmatmul.f32.gmra.mxu0 %v770
        %v1561 = vpop.f32.mrf.mxu0
        %v1562 = vadd.f32 0.0, %v1561
        %1563 = vmatmul.f32.gmra.mxu0 %v773
        %v1564 = vpop.f32.mrf.mxu0
        %v1565 = vadd.f32 0.0, %v1564
        %1566 = vmatmul.f32.gmra.mxu0 %v776
        %v1567 = vpop.f32.mrf.mxu0
        %v1568 = vadd.f32 0.0, %v1567
        %1569 = vmatmul.f32.gmra.mxu0 %v779
        %v1570 = vpop.f32.mrf.mxu0
        %v1571 = vadd.f32 0.0, %v1570
        %1572 = vmatmul.f32.gmra.mxu0 %v782
        %v1573 = vpop.f32.mrf.mxu0
        %v1574 = vadd.f32 0.0, %v1573
        %1575 = vmatmul.f32.gmra.mxu0 %v785
        %v1576 = vpop.f32.mrf.mxu0
        %v1577 = vadd.f32 0.0, %v1576
        %1578 = vmatmul.f32.gmra.mxu0 %v788
        %v1579 = vpop.f32.mrf.mxu0
        %v1580 = vadd.f32 0.0, %v1579
        %1581 = vmatmul.f32.gmra.mxu0 %v791
        %v1582 = vpop.f32.mrf.mxu0
        %v1583 = vadd.f32 0.0, %v1582
        %1584 = vmatmul.f32.gmra.mxu0 %v794
        %v1585 = vpop.f32.mrf.mxu0
        %v1586 = vadd.f32 0.0, %v1585
        %1587 = vmatmul.f32.gmra.mxu0 %v797
        %v1588 = vpop.f32.mrf.mxu0
        %v1589 = vadd.f32 0.0, %v1588
        %1590 = vmatmul.f32.gmra.mxu0 %v800
        %v1591 = vpop.f32.mrf.mxu0
        %v1592 = vadd.f32 0.0, %v1591
        %1593 = vmatmul.f32.gmra.mxu0 %v803
        %v1594 = vpop.f32.mrf.mxu0
        %v1595 = vadd.f32 0.0, %v1594
        %1596 = vmatmul.f32.gmra.mxu0 %v806
        %v1597 = vpop.f32.mrf.mxu0
        %v1598 = vadd.f32 0.0, %v1597
        %1599 = vmatmul.f32.gmra.mxu0 %v809
        %v1600 = vpop.f32.mrf.mxu0
        %v1601 = vadd.f32 0.0, %v1600
        %1602 = vmatmul.f32.gmra.mxu0 %v812
        %v1603 = vpop.f32.mrf.mxu0
        %v1604 = vadd.f32 0.0, %v1603
        %1605 = vmatmul.f32.gmra.mxu0 %v815
        %v1606 = vpop.f32.mrf.mxu0
        %v1607 = vadd.f32 0.0, %v1606
        %1608 = vmatmul.f32.gmra.mxu0 %v818
        %v1609 = vpop.f32.mrf.mxu0
        %v1610 = vadd.f32 0.0, %v1609
        %1611 = vmatmul.f32.gmra.mxu0 %v821
        %v1612 = vpop.f32.mrf.mxu0
        %v1613 = vadd.f32 0.0, %v1612
        %1614 = vmatmul.f32.gmra.mxu0 %v824
        %v1615 = vpop.f32.mrf.mxu0
        %v1616 = vadd.f32 0.0, %v1615
        %1617 = vmatmul.f32.gmra.mxu0 %v827
        %v1618 = vpop.f32.mrf.mxu0
        %v1619 = vadd.f32 0.0, %v1618
        %1620 = vmatmul.f32.gmra.mxu0 %v830
        %v1621 = vpop.f32.mrf.mxu0
        %v1622 = vadd.f32 0.0, %v1621
        %1623 = vmatmul.f32.gmra.mxu0 %v833
        %v1624 = vpop.f32.mrf.mxu0
        %v1625 = vadd.f32 0.0, %v1624
        %1626 = vmatmul.f32.gmra.mxu0 %v836
        %v1627 = vpop.f32.mrf.mxu0
        %v1628 = vadd.f32 0.0, %v1627
        %1629 = vmatmul.f32.gmra.mxu0 %v839
        %v1630 = vpop.f32.mrf.mxu0
        %v1631 = vadd.f32 0.0, %v1630
        %1632 = vmatmul.f32.gmra.mxu0 %v842
        %v1633 = vpop.f32.mrf.mxu0
        %v1634 = vadd.f32 0.0, %v1633
        %1635 = vmatmul.f32.gmra.mxu0 %v845
        %v1636 = vpop.f32.mrf.mxu0
        %v1637 = vadd.f32 0.0, %v1636
        %1638 = vmatmul.f32.gmra.mxu0 %v848
        %v1639 = vpop.f32.mrf.mxu0
        %v1640 = vadd.f32 0.0, %v1639
        %1641 = vmatmul.f32.gmra.mxu0 %v851
        %v1642 = vpop.f32.mrf.mxu0
        %v1643 = vadd.f32 0.0, %v1642
        %1644 = vmatmul.f32.gmra.mxu0 %v854
        %v1645 = vpop.f32.mrf.mxu0
        %v1646 = vadd.f32 0.0, %v1645
        %1647 = vmatmul.f32.gmra.mxu0 %v857
        %v1648 = vpop.f32.mrf.mxu0
        %v1649 = vadd.f32 0.0, %v1648
        %1650 = vmatmul.f32.gmra.mxu0 %v860
        %v1651 = vpop.f32.mrf.mxu0
        %v1652 = vadd.f32 0.0, %v1651
        %1653 = vmatmul.f32.gmra.mxu0 %v863
        %v1654 = vpop.f32.mrf.mxu0
        %v1655 = vadd.f32 0.0, %v1654
        %1656 = vmatmul.f32.gmra.mxu0 %v866
        %v1657 = vpop.f32.mrf.mxu0
        %v1658 = vadd.f32 0.0, %v1657
        %1659 = vmatmul.f32.gmra.mxu0 %v869
        %v1660 = vpop.f32.mrf.mxu0
        %v1661 = vadd.f32 0.0, %v1660
        %1662 = vmatmul.f32.gmra.mxu0 %v872
        %v1663 = vpop.f32.mrf.mxu0
        %v1664 = vadd.f32 0.0, %v1663
        %1665 = vmatmul.f32.gmra.mxu0 %v875
        %v1666 = vpop.f32.mrf.mxu0
        %v1667 = vadd.f32 0.0, %v1666
        %1668 = vmatmul.f32.gmra.mxu0 %v878
        %v1669 = vpop.f32.mrf.mxu0
        %v1670 = vadd.f32 0.0, %v1669
        %1671 = vmatmul.f32.gmra.mxu0 %v881
        %v1672 = vpop.f32.mrf.mxu0
        %v1673 = vadd.f32 0.0, %v1672
        %1674 = vmatmul.f32.gmra.mxu0 %v884
        %v1675 = vpop.f32.mrf.mxu0
        %v1676 = vadd.f32 0.0, %v1675
        %1677 = vmatmul.f32.gmra.mxu0 %v887
        %v1678 = vpop.f32.mrf.mxu0
        %v1679 = vadd.f32 0.0, %v1678
        %1680 = vmatmul.f32.gmra.mxu0 %v890
        %v1681 = vpop.f32.mrf.mxu0
        %v1682 = vadd.f32 0.0, %v1681
        %1683 = vmatmul.f32.gmra.mxu0 %v893
        %v1684 = vpop.f32.mrf.mxu0
        %v1685 = vadd.f32 0.0, %v1684
        %1686 = vmatmul.f32.gmra.mxu0 %v896
        %v1687 = vpop.f32.mrf.mxu0
        %v1688 = vadd.f32 0.0, %v1687
        %1689 = vmatmul.f32.gmra.mxu0 %v899
        %v1690 = vpop.f32.mrf.mxu0
        %v1691 = vadd.f32 0.0, %v1690
        %1692 = vmatmul.f32.gmra.mxu0 %v902
        %v1693 = vpop.f32.mrf.mxu0
        %v1694 = vadd.f32 0.0, %v1693
        %1695 = vmatmul.f32.gmra.mxu0 %v905
        %v1696 = vpop.f32.mrf.mxu0
        %v1697 = vadd.f32 0.0, %v1696
        %1698 = vmatmul.f32.gmra.mxu0 %v908
        %v1699 = vpop.f32.mrf.mxu0
        %v1700 = vadd.f32 0.0, %v1699
        %1701 = vmatmul.f32.gmra.mxu0 %v911
        %v1702 = vpop.f32.mrf.mxu0
        %v1703 = vadd.f32 0.0, %v1702
        %1704 = vmatmul.f32.gmra.mxu0 %v914
        %v1705 = vpop.f32.mrf.mxu0
        %v1706 = vadd.f32 0.0, %v1705
        %1707 = vmatmul.f32.gmra.mxu0 %v917
        %v1708 = vpop.f32.mrf.mxu0
        %v1709 = vadd.f32 0.0, %v1708
        %1710 = vmatmul.f32.gmra.mxu0 %v920
        %v1711 = vpop.f32.mrf.mxu0
        %v1712 = vadd.f32 0.0, %v1711
        %1713 = vmatmul.f32.gmra.mxu0 %v923
        %v1714 = vpop.f32.mrf.mxu0
        %v1715 = vadd.f32 0.0, %v1714
        %1716 = vmatmul.f32.gmra.mxu0 %v926
        %v1717 = vpop.f32.mrf.mxu0
        %v1718 = vadd.f32 0.0, %v1717
        %1719 = vmatmul.f32.gmra.mxu0 %v929
        %v1720 = vpop.f32.mrf.mxu0
        %v1721 = vadd.f32 0.0, %v1720
        %1722 = vmatmul.f32.gmra.mxu0 %v932
        %v1723 = vpop.f32.mrf.mxu0
        %v1724 = vadd.f32 0.0, %v1723
        %1725 = vmatmul.f32.gmra.mxu0 %v935
        %v1726 = vpop.f32.mrf.mxu0
        %v1727 = vadd.f32 0.0, %v1726
        %1728 = vmatmul.f32.gmra.mxu0 %v938
        %v1729 = vpop.f32.mrf.mxu0
        %v1730 = vadd.f32 0.0, %v1729
        %1731 = vmatmul.f32.gmra.mxu0 %v941
        %v1732 = vpop.f32.mrf.mxu0
        %v1733 = vadd.f32 0.0, %v1732
        %1734 = vmatmul.f32.gmra.mxu0 %v944
        %v1735 = vpop.f32.mrf.mxu0
        %v1736 = vadd.f32 0.0, %v1735
        %1737 = vmatmul.f32.gmra.mxu0 %v947
        %v1738 = vpop.f32.mrf.mxu0
        %v1739 = vadd.f32 0.0, %v1738
        %1740 = vmatmul.f32.gmra.mxu0 %v950
        %v1741 = vpop.f32.mrf.mxu0
        %v1742 = vadd.f32 0.0, %v1741
        %1743 = vmatmul.f32.gmra.mxu0 %v953
        %v1744 = vpop.f32.mrf.mxu0
        %v1745 = vadd.f32 0.0, %v1744
        %1746 = vmatmul.f32.gmra.mxu0 %v956
        %v1747 = vpop.f32.mrf.mxu0
        %v1748 = vadd.f32 0.0, %v1747
        %1749 = vmatmul.f32.gmra.mxu0 %v959
        %v1750 = vpop.f32.mrf.mxu0
        %v1751 = vadd.f32 0.0, %v1750
        %1752 = vmatmul.f32.gmra.mxu0 %v962
        %v1753 = vpop.f32.mrf.mxu0
        %v1754 = vadd.f32 0.0, %v1753
        %1755 = vmatmul.f32.gmra.mxu0 %v965
        %v1756 = vpop.f32.mrf.mxu0
        %v1757 = vadd.f32 0.0, %v1756
        %1758 = vmatmul.f32.gmra.mxu0 %v968
        %v1759 = vpop.f32.mrf.mxu0
        %v1760 = vadd.f32 0.0, %v1759
        %1761 = vmatmul.f32.gmra.mxu0 %v971
        %v1762 = vpop.f32.mrf.mxu0
        %v1763 = vadd.f32 0.0, %v1762
        %1764 = vmatmul.f32.gmra.mxu0 %v974
        %v1765 = vpop.f32.mrf.mxu0
        %v1766 = vadd.f32 0.0, %v1765
        %1767 = vmatmul.f32.gmra.mxu0 %v977
        %v1768 = vpop.f32.mrf.mxu0
        %v1769 = vadd.f32 0.0, %v1768
        %1770 = vmatmul.f32.gmra.mxu0 %v980
        %v1771 = vpop.f32.mrf.mxu0
        %v1772 = vadd.f32 0.0, %v1771
        %1773 = vmatmul.f32.gmra.mxu0 %v983
        %v1774 = vpop.f32.mrf.mxu0
        %v1775 = vadd.f32 0.0, %v1774
        %1776 = vmatmul.f32.gmra.mxu0 %v986
        %v1777 = vpop.f32.mrf.mxu0
        %v1778 = vadd.f32 0.0, %v1777
        %1779 = vmatmul.f32.gmra.mxu0 %v989
        %v1780 = vpop.f32.mrf.mxu0
        %v1781 = vadd.f32 0.0, %v1780
        %1782 = vmatmul.f32.gmra.mxu0 %v992
        %v1783 = vpop.f32.mrf.mxu0
        %v1784 = vadd.f32 0.0, %v1783
        %1785 = vmatmul.f32.gmra.mxu0 %v995
        %v1786 = vpop.f32.mrf.mxu0
        %v1787 = vadd.f32 0.0, %v1786
        %1788 = vmatmul.f32.gmra.mxu0 %v998
        %v1789 = vpop.f32.mrf.mxu0
        %v1790 = vadd.f32 0.0, %v1789
        %1791 = vmatmul.f32.gmra.mxu0 %v1001
        %v1792 = vpop.f32.mrf.mxu0
        %v1793 = vadd.f32 0.0, %v1792
        %1794 = vmatmul.f32.gmra.mxu0 %v1004
        %v1795 = vpop.f32.mrf.mxu0
        %v1796 = vadd.f32 0.0, %v1795
        %1797 = vmatmul.f32.gmra.mxu0 %v1007
        %v1798 = vpop.f32.mrf.mxu0
        %v1799 = vadd.f32 0.0, %v1798
        %1800 = vmatmul.f32.gmra.mxu0 %v1010
        %v1801 = vpop.f32.mrf.mxu0
        %v1802 = vadd.f32 0.0, %v1801
        %1803 = vmatmul.f32.gmra.mxu0 %v1013
        %v1804 = vpop.f32.mrf.mxu0
        %v1805 = vadd.f32 0.0, %v1804
        %1806 = vmatmul.f32.gmra.mxu0 %v1016
        %v1807 = vpop.f32.mrf.mxu0
        %v1808 = vadd.f32 0.0, %v1807
        %1809 = vmatmul.f32.gmra.mxu0 %v1019
        %v1810 = vpop.f32.mrf.mxu0
        %v1811 = vadd.f32 0.0, %v1810
        %1812 = vmatmul.f32.gmra.mxu0 %v1022
        %v1813 = vpop.f32.mrf.mxu0
        %v1814 = vadd.f32 0.0, %v1813
        %1815 = vmatmul.f32.gmra.mxu0 %v1025
        %v1816 = vpop.f32.mrf.mxu0
        %v1817 = vadd.f32 0.0, %v1816
        %1818 = vmatmul.f32.gmra.mxu0 %v1028
        %v1819 = vpop.f32.mrf.mxu0
        %v1820 = vadd.f32 0.0, %v1819
        %1821 = vmatmul.f32.gmra.mxu0 %v1031
        %v1822 = vpop.f32.mrf.mxu0
        %v1823 = vadd.f32 0.0, %v1822
        %1824 = vmatmul.f32.gmra.mxu0 %v1034
        %v1825 = vpop.f32.mrf.mxu0
        %v1826 = vadd.f32 0.0, %v1825
        %1827 = vmatmul.f32.gmra.mxu0 %v1037
        %v1828 = vpop.f32.mrf.mxu0
        %v1829 = vadd.f32 0.0, %v1828
        %1830 = vmatmul.f32.gmra.mxu0 %v1040
        %v1831 = vpop.f32.mrf.mxu0
        %v1832 = vadd.f32 0.0, %v1831
        %1833 = vmatmul.f32.gmra.mxu0 %v1043
        %v1834 = vpop.f32.mrf.mxu0
        %v1835 = vadd.f32 0.0, %v1834
        %1836 = vmatmul.f32.gmra.mxu0 %v1046
        %v1837 = vpop.f32.mrf.mxu0
        %v1838 = vadd.f32 0.0, %v1837
        %1839 = vmatmul.f32.gmra.mxu0 %v1049
        %v1840 = vpop.f32.mrf.mxu0
        %v1841 = vadd.f32 0.0, %v1840
        %1842 = vmatmul.f32.gmra.mxu0 %v1052
        %v1843 = vpop.f32.mrf.mxu0
        %v1844 = vadd.f32 0.0, %v1843
        %1845 = vmatmul.f32.gmra.mxu0 %v1055
        %v1846 = vpop.f32.mrf.mxu0
        %v1847 = vadd.f32 0.0, %v1846
        %1848 = vmatmul.f32.gmra.mxu0 %v1058
        %v1849 = vpop.f32.mrf.mxu0
        %v1850 = vadd.f32 0.0, %v1849
        %1851 = vmatmul.f32.gmra.mxu0 %v1061
        %v1852 = vpop.f32.mrf.mxu0
        %v1853 = vadd.f32 0.0, %v1852
        %1854 = vmatmul.f32.gmra.mxu0 %v1064
        %v1855 = vpop.f32.mrf.mxu0
        %v1856 = vadd.f32 0.0, %v1855
        %1857 = vmatmul.f32.gmra.mxu0 %v1067
        %v1858 = vpop.f32.mrf.mxu0
        %v1859 = vadd.f32 0.0, %v1858
        %1860 = vmatmul.f32.gmra.mxu0 %v1070
        %v1861 = vpop.f32.mrf.mxu0
        %v1862 = vadd.f32 0.0, %v1861
        %1863 = vmatmul.f32.gmra.mxu0 %v1073
        %v1864 = vpop.f32.mrf.mxu0
        %v1865 = vadd.f32 0.0, %v1864
        %1866 = vmatmul.f32.gmra.mxu0 %v1076
        %v1867 = vpop.f32.mrf.mxu0
        %v1868 = vadd.f32 0.0, %v1867
        %1869 = vmatmul.f32.gmra.mxu0 %v1079
        %v1870 = vpop.f32.mrf.mxu0
        %v1871 = vadd.f32 0.0, %v1870
        %1872 = vmatmul.f32.gmra.mxu0 %v1082
        %v1873 = vpop.f32.mrf.mxu0
        %v1874 = vadd.f32 0.0, %v1873
        %1875 = vmatmul.f32.gmra.mxu0 %v1085
        %v1876 = vpop.f32.mrf.mxu0
        %v1877 = vadd.f32 0.0, %v1876
        %1878 = vmatmul.f32.gmra.mxu0 %v1088
        %v1879 = vpop.f32.mrf.mxu0
        %v1880 = vadd.f32 0.0, %v1879
        %1881 = vmatmul.f32.gmra.mxu0 %v1091
        %v1882 = vpop.f32.mrf.mxu0
        %v1883 = vadd.f32 0.0, %v1882
        %1884 = vmatmul.f32.gmra.mxu0 %v1094
        %v1885 = vpop.f32.mrf.mxu0
        %v1886 = vadd.f32 0.0, %v1885
        %1887 = vmatmul.f32.gmra.mxu0 %v1097
        %v1888 = vpop.f32.mrf.mxu0
        %v1889 = vadd.f32 0.0, %v1888
        %1890 = vmatmul.f32.gmra.mxu0 %v1100
        %v1891 = vpop.f32.mrf.mxu0
        %v1892 = vadd.f32 0.0, %v1891
        %1893 = vmatmul.f32.gmra.mxu0 %v1103
        %v1894 = vpop.f32.mrf.mxu0
        %v1895 = vadd.f32 0.0, %v1894
        %1896 = vmatmul.f32.gmra.mxu0 %v1106
        %v1897 = vpop.f32.mrf.mxu0
        %v1898 = vadd.f32 0.0, %v1897
        %1899 = vmatmul.f32.gmra.mxu0 %v1109
        %v1900 = vpop.f32.mrf.mxu0
        %v1901 = vadd.f32 0.0, %v1900
        %1902 = vmatmul.f32.gmra.mxu0 %v1112
        %v1903 = vpop.f32.mrf.mxu0
        %v1904 = vadd.f32 0.0, %v1903
        %1905 = vmatmul.f32.gmra.mxu0 %v1115
        %v1906 = vpop.f32.mrf.mxu0
        %v1907 = vadd.f32 0.0, %v1906
        %1908 = vmatmul.f32.gmra.mxu0 %v1118
        %v1909 = vpop.f32.mrf.mxu0
        %v1910 = vadd.f32 0.0, %v1909
        %1911 = vmatmul.f32.gmra.mxu0 %v1121
        %v1912 = vpop.f32.mrf.mxu0
        %v1913 = vadd.f32 0.0, %v1912
        %1914 = vmatmul.f32.gmra.mxu0 %v1124
        %v1915 = vpop.f32.mrf.mxu0
        %v1916 = vadd.f32 0.0, %v1915
        %1917 = vmatmul.f32.gmra.mxu0 %v1127
        %v1918 = vpop.f32.mrf.mxu0
        %v1919 = vadd.f32 0.0, %v1918
        %1920 = vmatmul.f32.gmra.mxu0 %v1130
        %v1921 = vpop.f32.mrf.mxu0
        %v1922 = vadd.f32 0.0, %v1921
        %1923 = vmatmul.f32.gmra.mxu0 %v1133
        %v1924 = vpop.f32.mrf.mxu0
        %v1925 = vadd.f32 0.0, %v1924
        %1926 = vmatmul.f32.gmra.mxu0 %v1136
        %v1927 = vpop.f32.mrf.mxu0
        %v1928 = vadd.f32 0.0, %v1927
        %1929 = vmatmul.f32.gmra.mxu0 %v1139
        %v1930 = vpop.f32.mrf.mxu0
        %v1931 = vadd.f32 0.0, %v1930
        %1932 = vmatmul.f32.gmra.mxu0 %v1142
        %v1933 = vpop.f32.mrf.mxu0
        %v1934 = vadd.f32 0.0, %v1933
        %1935 = vmatmul.f32.gmra.mxu0 %v1145
        %v1936 = vpop.f32.mrf.mxu0
        %v1937 = vadd.f32 0.0, %v1936
        %1938 = vmatmul.f32.gmra.mxu0 %v1148
        %v1939 = vpop.f32.mrf.mxu0
        %v1940 = vadd.f32 0.0, %v1939
        %1941 = vmatmul.f32.gmra.mxu0 %v1151
        %v1942 = vpop.f32.mrf.mxu0
        %v1943 = vadd.f32 0.0, %v1942
        %1944 = vmatmul.f32.gmra.mxu0 %v1154
        %v1945 = vpop.f32.mrf.mxu0
        %v1946 = vadd.f32 0.0, %v1945
        %1947 = vmatmul.f32.gmra.mxu0 %v1157
        %v1948 = vpop.f32.mrf.mxu0
        %v1949 = vadd.f32 0.0, %v1948
        %1950 = vmatmul.f32.gmra.mxu0 %v1160
        %v1951 = vpop.f32.mrf.mxu0
        %v1952 = vadd.f32 0.0, %v1951
        %1953 = vmatmul.f32.gmra.mxu0 %v1163
        %v1954 = vpop.f32.mrf.mxu0
        %v1955 = vadd.f32 0.0, %v1954
        %1956 = vmatmul.f32.gmra.mxu0 %v1166
        %v1957 = vpop.f32.mrf.mxu0
        %v1958 = vadd.f32 0.0, %v1957
        %1959 = vmatmul.f32.gmra.mxu0 %v1169
        %v1960 = vpop.f32.mrf.mxu0
        %v1961 = vadd.f32 0.0, %v1960
        %1962 = vmatmul.f32.gmra.mxu0 %v1172
        %v1963 = vpop.f32.mrf.mxu0
        %v1964 = vadd.f32 0.0, %v1963
        %1965 = vmatmul.f32.gmra.mxu0 %v1175
        %v1966 = vpop.f32.mrf.mxu0
        %v1967 = vadd.f32 0.0, %v1966
        %1968 = vmatmul.f32.gmra.mxu0 %v1178
        %v1969 = vpop.f32.mrf.mxu0
        %v1970 = vadd.f32 0.0, %v1969
        %1971 = vmatmul.f32.gmra.mxu0 %v1181
        %v1972 = vpop.f32.mrf.mxu0
        %v1973 = vadd.f32 0.0, %v1972
        %1974 = vmatmul.f32.gmra.mxu0 %v1184
        %v1975 = vpop.f32.mrf.mxu0
        %v1976 = vadd.f32 0.0, %v1975
        %1977 = vmatmul.f32.gmra.mxu0 %v1187
        %v1978 = vpop.f32.mrf.mxu0
        %v1979 = vadd.f32 0.0, %v1978
        %1980 = vmatmul.f32.gmra.mxu0 %v1190
        %v1981 = vpop.f32.mrf.mxu0
        %v1982 = vadd.f32 0.0, %v1981
        %1983 = vmatmul.f32.gmra.mxu0 %v1193
        %v1984 = vpop.f32.mrf.mxu0
        %v1985 = vadd.f32 0.0, %v1984
        %1986 = vdwg.mxu0
        %vm1987 = vcmask 72704
        %1988 = vst.msk [vmem:[%s145] sm:$0xff] %vm1987, %v1217
        %1989 = vst.msk [vmem:[%s145 + $0x8] sm:$0xff] %vm1987, %v1220
        %1990 = vst.msk [vmem:[%s145 + $0x10] sm:$0xff] %vm1987, %v1223
        %1991 = vst.msk [vmem:[%s145 + $0x18] sm:$0xff] %vm1987, %v1226
        %1992 = vst.msk [vmem:[%s145 + $0x20] sm:$0xff] %vm1987, %v1229
        %1993 = vst.msk [vmem:[%s145 + $0x28] sm:$0xff] %vm1987, %v1232
        %1994 = vst.msk [vmem:[%s145 + $0x30] sm:$0xff] %vm1987, %v1235
        %1995 = vst.msk [vmem:[%s145 + $0x38] sm:$0xff] %vm1987, %v1238
        %1996 = vst.msk [vmem:[%s145 + $0x40] sm:$0xff] %vm1987, %v1241
        %1997 = vst.msk [vmem:[%s145 + $0x48] sm:$0xff] %vm1987, %v1244
        %1998 = vst.msk [vmem:[%s145 + $0x50] sm:$0xff] %vm1987, %v1247
        %1999 = vst.msk [vmem:[%s145 + $0x58] sm:$0xff] %vm1987, %v1250
        %2000 = vst.msk [vmem:[%s145 + $0x60] sm:$0xff] %vm1987, %v1253
        %2001 = vst.msk [vmem:[%s145 + $0x68] sm:$0xff] %vm1987, %v1256
        %2002 = vst.msk [vmem:[%s145 + $0x70] sm:$0xff] %vm1987, %v1259
        %2003 = vst.msk [vmem:[%s145 + $0x78] sm:$0xff] %vm1987, %v1262
        %2004 = vst.msk [vmem:[%s145 + $0x80] sm:$0xff] %vm1987, %v1265
        %2005 = vst.msk [vmem:[%s145 + $0x88] sm:$0xff] %vm1987, %v1268
        %2006 = vst.msk [vmem:[%s145 + $0x90] sm:$0xff] %vm1987, %v1271
        %2007 = vst.msk [vmem:[%s145 + $0x98] sm:$0xff] %vm1987, %v1274
        %2008 = vst.msk [vmem:[%s145 + $0xa0] sm:$0xff] %vm1987, %v1277
        %2009 = vst.msk [vmem:[%s145 + $0xa8] sm:$0xff] %vm1987, %v1280
        %2010 = vst.msk [vmem:[%s145 + $0xb0] sm:$0xff] %vm1987, %v1283
        %2011 = vst.msk [vmem:[%s145 + $0xb8] sm:$0xff] %vm1987, %v1286
        %2012 = vst.msk [vmem:[%s145 + $0xc0] sm:$0xff] %vm1987, %v1289
        %2013 = vst.msk [vmem:[%s145 + $0xc8] sm:$0xff] %vm1987, %v1292
        %2014 = vst.msk [vmem:[%s145 + $0xd0] sm:$0xff] %vm1987, %v1295
        %2015 = vst.msk [vmem:[%s145 + $0xd8] sm:$0xff] %vm1987, %v1298
        %2016 = vst.msk [vmem:[%s145 + $0xe0] sm:$0xff] %vm1987, %v1301
        %2017 = vst.msk [vmem:[%s145 + $0xe8] sm:$0xff] %vm1987, %v1304
        %2018 = vst.msk [vmem:[%s145 + $0xf0] sm:$0xff] %vm1987, %v1307
        %2019 = vst.msk [vmem:[%s145 + $0xf8] sm:$0xff] %vm1987, %v1310
        %2020 = vst.msk [vmem:[%s145 + $0x100] sm:$0xff] %vm1987, %v1313
        %2021 = vst.msk [vmem:[%s145 + $0x108] sm:$0xff] %vm1987, %v1316
        %2022 = vst.msk [vmem:[%s145 + $0x110] sm:$0xff] %vm1987, %v1319
        %2023 = vst.msk [vmem:[%s145 + $0x118] sm:$0xff] %vm1987, %v1322
        %2024 = vst.msk [vmem:[%s145 + $0x120] sm:$0xff] %vm1987, %v1325
        %2025 = vst.msk [vmem:[%s145 + $0x128] sm:$0xff] %vm1987, %v1328
        %2026 = vst.msk [vmem:[%s145 + $0x130] sm:$0xff] %vm1987, %v1331
        %2027 = vst.msk [vmem:[%s145 + $0x138] sm:$0xff] %vm1987, %v1334
        %2028 = vst.msk [vmem:[%s145 + $0x140] sm:$0xff] %vm1987, %v1337
        %2029 = vst.msk [vmem:[%s145 + $0x148] sm:$0xff] %vm1987, %v1340
        %2030 = vst.msk [vmem:[%s145 + $0x150] sm:$0xff] %vm1987, %v1343
        %2031 = vst.msk [vmem:[%s145 + $0x158] sm:$0xff] %vm1987, %v1346
        %2032 = vst.msk [vmem:[%s145 + $0x160] sm:$0xff] %vm1987, %v1349
        %2033 = vst.msk [vmem:[%s145 + $0x168] sm:$0xff] %vm1987, %v1352
        %2034 = vst.msk [vmem:[%s145 + $0x170] sm:$0xff] %vm1987, %v1355
        %2035 = vst.msk [vmem:[%s145 + $0x178] sm:$0xff] %vm1987, %v1358
        %2036 = vst.msk [vmem:[%s145 + $0x180] sm:$0xff] %vm1987, %v1361
        %2037 = vst.msk [vmem:[%s145 + $0x188] sm:$0xff] %vm1987, %v1364
        %2038 = vst.msk [vmem:[%s145 + $0x190] sm:$0xff] %vm1987, %v1367
        %2039 = vst.msk [vmem:[%s145 + $0x198] sm:$0xff] %vm1987, %v1370
        %2040 = vst.msk [vmem:[%s145 + $0x1a0] sm:$0xff] %vm1987, %v1373
        %2041 = vst.msk [vmem:[%s145 + $0x1a8] sm:$0xff] %vm1987, %v1376
        %2042 = vst.msk [vmem:[%s145 + $0x1b0] sm:$0xff] %vm1987, %v1379
        %2043 = vst.msk [vmem:[%s145 + $0x1b8] sm:$0xff] %vm1987, %v1382
        %2044 = vst.msk [vmem:[%s145 + $0x1c0] sm:$0xff] %vm1987, %v1385
        %2045 = vst.msk [vmem:[%s145 + $0x1c8] sm:$0xff] %vm1987, %v1388
        %2046 = vst.msk [vmem:[%s145 + $0x1d0] sm:$0xff] %vm1987, %v1391
        %2047 = vst.msk [vmem:[%s145 + $0x1d8] sm:$0xff] %vm1987, %v1394
        %2048 = vst.msk [vmem:[%s145 + $0x1e0] sm:$0xff] %vm1987, %v1397
        %2049 = vst.msk [vmem:[%s145 + $0x1e8] sm:$0xff] %vm1987, %v1400
        %2050 = vst.msk [vmem:[%s145 + $0x1f0] sm:$0xff] %vm1987, %v1403
        %2051 = vst.msk [vmem:[%s145 + $0x1f8] sm:$0xff] %vm1987, %v1406
        %2052 = vst.msk [vmem:[%s145 + $0x200] sm:$0xff] %vm1987, %v1409
        %2053 = vst.msk [vmem:[%s145 + $0x208] sm:$0xff] %vm1987, %v1412
        %2054 = vst.msk [vmem:[%s145 + $0x210] sm:$0xff] %vm1987, %v1415
        %2055 = vst.msk [vmem:[%s145 + $0x218] sm:$0xff] %vm1987, %v1418
        %2056 = vst.msk [vmem:[%s145 + $0x220] sm:$0xff] %vm1987, %v1421
        %2057 = vst.msk [vmem:[%s145 + $0x228] sm:$0xff] %vm1987, %v1424
        %2058 = vst.msk [vmem:[%s145 + $0x230] sm:$0xff] %vm1987, %v1427
        %2059 = vst.msk [vmem:[%s145 + $0x238] sm:$0xff] %vm1987, %v1430
        %2060 = vst.msk [vmem:[%s145 + $0x240] sm:$0xff] %vm1987, %v1433
        %2061 = vst.msk [vmem:[%s145 + $0x248] sm:$0xff] %vm1987, %v1436
        %2062 = vst.msk [vmem:[%s145 + $0x250] sm:$0xff] %vm1987, %v1439
        %2063 = vst.msk [vmem:[%s145 + $0x258] sm:$0xff] %vm1987, %v1442
        %2064 = vst.msk [vmem:[%s145 + $0x260] sm:$0xff] %vm1987, %v1445
        %2065 = vst.msk [vmem:[%s145 + $0x268] sm:$0xff] %vm1987, %v1448
        %2066 = vst.msk [vmem:[%s145 + $0x270] sm:$0xff] %vm1987, %v1451
        %2067 = vst.msk [vmem:[%s145 + $0x278] sm:$0xff] %vm1987, %v1454
        %2068 = vst.msk [vmem:[%s145 + $0x280] sm:$0xff] %vm1987, %v1457
        %2069 = vst.msk [vmem:[%s145 + $0x288] sm:$0xff] %vm1987, %v1460
        %2070 = vst.msk [vmem:[%s145 + $0x290] sm:$0xff] %vm1987, %v1463
        %2071 = vst.msk [vmem:[%s145 + $0x298] sm:$0xff] %vm1987, %v1466
        %2072 = vst.msk [vmem:[%s145 + $0x2a0] sm:$0xff] %vm1987, %v1469
        %2073 = vst.msk [vmem:[%s145 + $0x2a8] sm:$0xff] %vm1987, %v1472
        %2074 = vst.msk [vmem:[%s145 + $0x2b0] sm:$0xff] %vm1987, %v1475
        %2075 = vst.msk [vmem:[%s145 + $0x2b8] sm:$0xff] %vm1987, %v1478
        %2076 = vst.msk [vmem:[%s145 + $0x2c0] sm:$0xff] %vm1987, %v1481
        %2077 = vst.msk [vmem:[%s145 + $0x2c8] sm:$0xff] %vm1987, %v1484
        %2078 = vst.msk [vmem:[%s145 + $0x2d0] sm:$0xff] %vm1987, %v1487
        %2079 = vst.msk [vmem:[%s145 + $0x2d8] sm:$0xff] %vm1987, %v1490
        %2080 = vst.msk [vmem:[%s145 + $0x2e0] sm:$0xff] %vm1987, %v1493
        %2081 = vst.msk [vmem:[%s145 + $0x2e8] sm:$0xff] %vm1987, %v1496
        %2082 = vst.msk [vmem:[%s145 + $0x2f0] sm:$0xff] %vm1987, %v1499
        %2083 = vst.msk [vmem:[%s145 + $0x2f8] sm:$0xff] %vm1987, %v1502
        %2084 = vst.msk [vmem:[%s145 + $0x300] sm:$0xff] %vm1987, %v1505
        %2085 = vst.msk [vmem:[%s145 + $0x308] sm:$0xff] %vm1987, %v1508
        %2086 = vst.msk [vmem:[%s145 + $0x310] sm:$0xff] %vm1987, %v1511
        %2087 = vst.msk [vmem:[%s145 + $0x318] sm:$0xff] %vm1987, %v1514
        %2088 = vst.msk [vmem:[%s145 + $0x320] sm:$0xff] %vm1987, %v1517
        %2089 = vst.msk [vmem:[%s145 + $0x328] sm:$0xff] %vm1987, %v1520
        %2090 = vst.msk [vmem:[%s145 + $0x330] sm:$0xff] %vm1987, %v1523
        %2091 = vst.msk [vmem:[%s145 + $0x338] sm:$0xff] %vm1987, %v1526
        %2092 = vst.msk [vmem:[%s145 + $0x340] sm:$0xff] %vm1987, %v1529
        %2093 = vst.msk [vmem:[%s145 + $0x348] sm:$0xff] %vm1987, %v1532
        %2094 = vst.msk [vmem:[%s145 + $0x350] sm:$0xff] %vm1987, %v1535
        %2095 = vst.msk [vmem:[%s145 + $0x358] sm:$0xff] %vm1987, %v1538
        %2096 = vst.msk [vmem:[%s145 + $0x360] sm:$0xff] %vm1987, %v1541
        %2097 = vst.msk [vmem:[%s145 + $0x368] sm:$0xff] %vm1987, %v1544
        %2098 = vst.msk [vmem:[%s145 + $0x370] sm:$0xff] %vm1987, %v1547
        %2099 = vst.msk [vmem:[%s145 + $0x378] sm:$0xff] %vm1987, %v1550
        %2100 = vst.msk [vmem:[%s145 + $0x380] sm:$0xff] %vm1987, %v1553
        %2101 = vst.msk [vmem:[%s145 + $0x388] sm:$0xff] %vm1987, %v1556
        %2102 = vst.msk [vmem:[%s145 + $0x390] sm:$0xff] %vm1987, %v1559
        %2103 = vst.msk [vmem:[%s145 + $0x398] sm:$0xff] %vm1987, %v1562
        %2104 = vst.msk [vmem:[%s145 + $0x3a0] sm:$0xff] %vm1987, %v1565
        %2105 = vst.msk [vmem:[%s145 + $0x3a8] sm:$0xff] %vm1987, %v1568
        %2106 = vst.msk [vmem:[%s145 + $0x3b0] sm:$0xff] %vm1987, %v1571
        %2107 = vst.msk [vmem:[%s145 + $0x3b8] sm:$0xff] %vm1987, %v1574
        %2108 = vst.msk [vmem:[%s145 + $0x3c0] sm:$0xff] %vm1987, %v1577
        %2109 = vst.msk [vmem:[%s145 + $0x3c8] sm:$0xff] %vm1987, %v1580
        %2110 = vst.msk [vmem:[%s145 + $0x3d0] sm:$0xff] %vm1987, %v1583
        %2111 = vst.msk [vmem:[%s145 + $0x3d8] sm:$0xff] %vm1987, %v1586
        %2112 = vst.msk [vmem:[%s145 + $0x3e0] sm:$0xff] %vm1987, %v1589
        %2113 = vst.msk [vmem:[%s145 + $0x3e8] sm:$0xff] %vm1987, %v1592
        %2114 = vst.msk [vmem:[%s145 + $0x3f0] sm:$0xff] %vm1987, %v1595
        %2115 = vst.msk [vmem:[%s145 + $0x3f8] sm:$0xff] %vm1987, %v1598
        %2116 = vst.msk [vmem:[%s145 + $0x400] sm:$0xff] %vm1987, %v1601
        %2117 = vst.msk [vmem:[%s145 + $0x408] sm:$0xff] %vm1987, %v1604
        %2118 = vst.msk [vmem:[%s145 + $0x410] sm:$0xff] %vm1987, %v1607
        %2119 = vst.msk [vmem:[%s145 + $0x418] sm:$0xff] %vm1987, %v1610
        %2120 = vst.msk [vmem:[%s145 + $0x420] sm:$0xff] %vm1987, %v1613
        %2121 = vst.msk [vmem:[%s145 + $0x428] sm:$0xff] %vm1987, %v1616
        %2122 = vst.msk [vmem:[%s145 + $0x430] sm:$0xff] %vm1987, %v1619
        %2123 = vst.msk [vmem:[%s145 + $0x438] sm:$0xff] %vm1987, %v1622
        %2124 = vst.msk [vmem:[%s145 + $0x440] sm:$0xff] %vm1987, %v1625
        %2125 = vst.msk [vmem:[%s145 + $0x448] sm:$0xff] %vm1987, %v1628
        %2126 = vst.msk [vmem:[%s145 + $0x450] sm:$0xff] %vm1987, %v1631
        %2127 = vst.msk [vmem:[%s145 + $0x458] sm:$0xff] %vm1987, %v1634
        %2128 = vst.msk [vmem:[%s145 + $0x460] sm:$0xff] %vm1987, %v1637
        %2129 = vst.msk [vmem:[%s145 + $0x468] sm:$0xff] %vm1987, %v1640
        %2130 = vst.msk [vmem:[%s145 + $0x470] sm:$0xff] %vm1987, %v1643
        %2131 = vst.msk [vmem:[%s145 + $0x478] sm:$0xff] %vm1987, %v1646
        %2132 = vst.msk [vmem:[%s145 + $0x480] sm:$0xff] %vm1987, %v1649
        %2133 = vst.msk [vmem:[%s145 + $0x488] sm:$0xff] %vm1987, %v1652
        %2134 = vst.msk [vmem:[%s145 + $0x490] sm:$0xff] %vm1987, %v1655
        %2135 = vst.msk [vmem:[%s145 + $0x498] sm:$0xff] %vm1987, %v1658
        %2136 = vst.msk [vmem:[%s145 + $0x4a0] sm:$0xff] %vm1987, %v1661
        %2137 = vst.msk [vmem:[%s145 + $0x4a8] sm:$0xff] %vm1987, %v1664
        %2138 = vst.msk [vmem:[%s145 + $0x4b0] sm:$0xff] %vm1987, %v1667
        %2139 = vst.msk [vmem:[%s145 + $0x4b8] sm:$0xff] %vm1987, %v1670
        %2140 = vst.msk [vmem:[%s145 + $0x4c0] sm:$0xff] %vm1987, %v1673
        %2141 = vst.msk [vmem:[%s145 + $0x4c8] sm:$0xff] %vm1987, %v1676
        %2142 = vst.msk [vmem:[%s145 + $0x4d0] sm:$0xff] %vm1987, %v1679
        %2143 = vst.msk [vmem:[%s145 + $0x4d8] sm:$0xff] %vm1987, %v1682
        %2144 = vst.msk [vmem:[%s145 + $0x4e0] sm:$0xff] %vm1987, %v1685
        %2145 = vst.msk [vmem:[%s145 + $0x4e8] sm:$0xff] %vm1987, %v1688
        %2146 = vst.msk [vmem:[%s145 + $0x4f0] sm:$0xff] %vm1987, %v1691
        %2147 = vst.msk [vmem:[%s145 + $0x4f8] sm:$0xff] %vm1987, %v1694
        %2148 = vst.msk [vmem:[%s145 + $0x500] sm:$0xff] %vm1987, %v1697
        %2149 = vst.msk [vmem:[%s145 + $0x508] sm:$0xff] %vm1987, %v1700
        %2150 = vst.msk [vmem:[%s145 + $0x510] sm:$0xff] %vm1987, %v1703
        %2151 = vst.msk [vmem:[%s145 + $0x518] sm:$0xff] %vm1987, %v1706
        %2152 = vst.msk [vmem:[%s145 + $0x520] sm:$0xff] %vm1987, %v1709
        %2153 = vst.msk [vmem:[%s145 + $0x528] sm:$0xff] %vm1987, %v1712
        %2154 = vst.msk [vmem:[%s145 + $0x530] sm:$0xff] %vm1987, %v1715
        %2155 = vst.msk [vmem:[%s145 + $0x538] sm:$0xff] %vm1987, %v1718
        %2156 = vst.msk [vmem:[%s145 + $0x540] sm:$0xff] %vm1987, %v1721
        %2157 = vst.msk [vmem:[%s145 + $0x548] sm:$0xff] %vm1987, %v1724
        %2158 = vst.msk [vmem:[%s145 + $0x550] sm:$0xff] %vm1987, %v1727
        %2159 = vst.msk [vmem:[%s145 + $0x558] sm:$0xff] %vm1987, %v1730
        %2160 = vst.msk [vmem:[%s145 + $0x560] sm:$0xff] %vm1987, %v1733
        %2161 = vst.msk [vmem:[%s145 + $0x568] sm:$0xff] %vm1987, %v1736
        %2162 = vst.msk [vmem:[%s145 + $0x570] sm:$0xff] %vm1987, %v1739
        %2163 = vst.msk [vmem:[%s145 + $0x578] sm:$0xff] %vm1987, %v1742
        %2164 = vst.msk [vmem:[%s145 + $0x580] sm:$0xff] %vm1987, %v1745
        %2165 = vst.msk [vmem:[%s145 + $0x588] sm:$0xff] %vm1987, %v1748
        %2166 = vst.msk [vmem:[%s145 + $0x590] sm:$0xff] %vm1987, %v1751
        %2167 = vst.msk [vmem:[%s145 + $0x598] sm:$0xff] %vm1987, %v1754
        %2168 = vst.msk [vmem:[%s145 + $0x5a0] sm:$0xff] %vm1987, %v1757
        %2169 = vst.msk [vmem:[%s145 + $0x5a8] sm:$0xff] %vm1987, %v1760
        %2170 = vst.msk [vmem:[%s145 + $0x5b0] sm:$0xff] %vm1987, %v1763
        %2171 = vst.msk [vmem:[%s145 + $0x5b8] sm:$0xff] %vm1987, %v1766
        %2172 = vst.msk [vmem:[%s145 + $0x5c0] sm:$0xff] %vm1987, %v1769
        %2173 = vst.msk [vmem:[%s145 + $0x5c8] sm:$0xff] %vm1987, %v1772
        %2174 = vst.msk [vmem:[%s145 + $0x5d0] sm:$0xff] %vm1987, %v1775
        %2175 = vst.msk [vmem:[%s145 + $0x5d8] sm:$0xff] %vm1987, %v1778
        %2176 = vst.msk [vmem:[%s145 + $0x5e0] sm:$0xff] %vm1987, %v1781
        %2177 = vst.msk [vmem:[%s145 + $0x5e8] sm:$0xff] %vm1987, %v1784
        %2178 = vst.msk [vmem:[%s145 + $0x5f0] sm:$0xff] %vm1987, %v1787
        %2179 = vst.msk [vmem:[%s145 + $0x5f8] sm:$0xff] %vm1987, %v1790
        %2180 = vst.msk [vmem:[%s145 + $0x600] sm:$0xff] %vm1987, %v1793
        %2181 = vst.msk [vmem:[%s145 + $0x608] sm:$0xff] %vm1987, %v1796
        %2182 = vst.msk [vmem:[%s145 + $0x610] sm:$0xff] %vm1987, %v1799
        %2183 = vst.msk [vmem:[%s145 + $0x618] sm:$0xff] %vm1987, %v1802
        %2184 = vst.msk [vmem:[%s145 + $0x620] sm:$0xff] %vm1987, %v1805
        %2185 = vst.msk [vmem:[%s145 + $0x628] sm:$0xff] %vm1987, %v1808
        %2186 = vst.msk [vmem:[%s145 + $0x630] sm:$0xff] %vm1987, %v1811
        %2187 = vst.msk [vmem:[%s145 + $0x638] sm:$0xff] %vm1987, %v1814
        %2188 = vst.msk [vmem:[%s145 + $0x640] sm:$0xff] %vm1987, %v1817
        %2189 = vst.msk [vmem:[%s145 + $0x648] sm:$0xff] %vm1987, %v1820
        %2190 = vst.msk [vmem:[%s145 + $0x650] sm:$0xff] %vm1987, %v1823
        %2191 = vst.msk [vmem:[%s145 + $0x658] sm:$0xff] %vm1987, %v1826
        %2192 = vst.msk [vmem:[%s145 + $0x660] sm:$0xff] %vm1987, %v1829
        %2193 = vst.msk [vmem:[%s145 + $0x668] sm:$0xff] %vm1987, %v1832
        %2194 = vst.msk [vmem:[%s145 + $0x670] sm:$0xff] %vm1987, %v1835
        %2195 = vst.msk [vmem:[%s145 + $0x678] sm:$0xff] %vm1987, %v1838
        %2196 = vst.msk [vmem:[%s145 + $0x680] sm:$0xff] %vm1987, %v1841
        %2197 = vst.msk [vmem:[%s145 + $0x688] sm:$0xff] %vm1987, %v1844
        %2198 = vst.msk [vmem:[%s145 + $0x690] sm:$0xff] %vm1987, %v1847
        %2199 = vst.msk [vmem:[%s145 + $0x698] sm:$0xff] %vm1987, %v1850
        %2200 = vst.msk [vmem:[%s145 + $0x6a0] sm:$0xff] %vm1987, %v1853
        %2201 = vst.msk [vmem:[%s145 + $0x6a8] sm:$0xff] %vm1987, %v1856
        %2202 = vst.msk [vmem:[%s145 + $0x6b0] sm:$0xff] %vm1987, %v1859
        %2203 = vst.msk [vmem:[%s145 + $0x6b8] sm:$0xff] %vm1987, %v1862
        %2204 = vst.msk [vmem:[%s145 + $0x6c0] sm:$0xff] %vm1987, %v1865
        %2205 = vst.msk [vmem:[%s145 + $0x6c8] sm:$0xff] %vm1987, %v1868
        %2206 = vst.msk [vmem:[%s145 + $0x6d0] sm:$0xff] %vm1987, %v1871
        %2207 = vst.msk [vmem:[%s145 + $0x6d8] sm:$0xff] %vm1987, %v1874
        %2208 = vst.msk [vmem:[%s145 + $0x6e0] sm:$0xff] %vm1987, %v1877
        %2209 = vst.msk [vmem:[%s145 + $0x6e8] sm:$0xff] %vm1987, %v1880
        %2210 = vst.msk [vmem:[%s145 + $0x6f0] sm:$0xff] %vm1987, %v1883
        %2211 = vst.msk [vmem:[%s145 + $0x6f8] sm:$0xff] %vm1987, %v1886
        %2212 = vst.msk [vmem:[%s145 + $0x700] sm:$0xff] %vm1987, %v1889
        %2213 = vst.msk [vmem:[%s145 + $0x708] sm:$0xff] %vm1987, %v1892
        %2214 = vst.msk [vmem:[%s145 + $0x710] sm:$0xff] %vm1987, %v1895
        %2215 = vst.msk [vmem:[%s145 + $0x718] sm:$0xff] %vm1987, %v1898
        %2216 = vst.msk [vmem:[%s145 + $0x720] sm:$0xff] %vm1987, %v1901
        %2217 = vst.msk [vmem:[%s145 + $0x728] sm:$0xff] %vm1987, %v1904
        %2218 = vst.msk [vmem:[%s145 + $0x730] sm:$0xff] %vm1987, %v1907
        %2219 = vst.msk [vmem:[%s145 + $0x738] sm:$0xff] %vm1987, %v1910
        %2220 = vst.msk [vmem:[%s145 + $0x740] sm:$0xff] %vm1987, %v1913
        %2221 = vst.msk [vmem:[%s145 + $0x748] sm:$0xff] %vm1987, %v1916
        %2222 = vst.msk [vmem:[%s145 + $0x750] sm:$0xff] %vm1987, %v1919
        %2223 = vst.msk [vmem:[%s145 + $0x758] sm:$0xff] %vm1987, %v1922
        %2224 = vst.msk [vmem:[%s145 + $0x760] sm:$0xff] %vm1987, %v1925
        %2225 = vst.msk [vmem:[%s145 + $0x768] sm:$0xff] %vm1987, %v1928
        %2226 = vst.msk [vmem:[%s145 + $0x770] sm:$0xff] %vm1987, %v1931
        %2227 = vst.msk [vmem:[%s145 + $0x778] sm:$0xff] %vm1987, %v1934
        %2228 = vst.msk [vmem:[%s145 + $0x780] sm:$0xff] %vm1987, %v1937
        %2229 = vst.msk [vmem:[%s145 + $0x788] sm:$0xff] %vm1987, %v1940
        %2230 = vst.msk [vmem:[%s145 + $0x790] sm:$0xff] %vm1987, %v1943
        %2231 = vst.msk [vmem:[%s145 + $0x798] sm:$0xff] %vm1987, %v1946
        %2232 = vst.msk [vmem:[%s145 + $0x7a0] sm:$0xff] %vm1987, %v1949
        %2233 = vst.msk [vmem:[%s145 + $0x7a8] sm:$0xff] %vm1987, %v1952
        %2234 = vst.msk [vmem:[%s145 + $0x7b0] sm:$0xff] %vm1987, %v1955
        %2235 = vst.msk [vmem:[%s145 + $0x7b8] sm:$0xff] %vm1987, %v1958
        %2236 = vst.msk [vmem:[%s145 + $0x7c0] sm:$0xff] %vm1987, %v1961
        %2237 = vst.msk [vmem:[%s145 + $0x7c8] sm:$0xff] %vm1987, %v1964
        %2238 = vst.msk [vmem:[%s145 + $0x7d0] sm:$0xff] %vm1987, %v1967
        %2239 = vst.msk [vmem:[%s145 + $0x7d8] sm:$0xff] %vm1987, %v1970
        %2240 = vst.msk [vmem:[%s145 + $0x7e0] sm:$0xff] %vm1987, %v1973
        %2241 = vst.msk [vmem:[%s145 + $0x7e8] sm:$0xff] %vm1987, %v1976
        %2242 = vst.msk [vmem:[%s145 + $0x7f0] sm:$0xff] %vm1987, %v1979
        %2243 = vst.msk [vmem:[%s145 + $0x7f8] sm:$0xff] %vm1987, %v1982
        %2244 = vst.msk [vmem:[%s145 + $0x800] sm:$0xff] %vm1987, %v1985
        %s2245 = sand.u32 %s68, 1
        %s2246 = sand.u32 %s68, 1
        %s2247 = smul.addr %s2246, 2056
        %s2248 = scalar_lea.vmem [#allocation2], %s2247
        // Predicated region
        $region29: #{tpu_custom_call.1} parent=27 // pred_check
          %p2249 = pneg %p78
        $region30: #{tpu_custom_call.1} parent=27 // pred_check_branch
          %2251 = sbr.rel (%p2249) target = $region32
        $region31: #{tpu_custom_call.1} parent=27 // pred_region
          %s2252 = smul.u32 257, %s13
          %s2253 = ssub.s32 513, %s2252
          %p2254 = scmp.lt.s32.totalorder %s2253, 257
          %s2255 = scalar_select %p2254, %s2253, 257
          %s2256 = smul.u32 8, %s2255
          %p2257 = scmp.ne.s32.totalorder 0, %s2256
          %s2258 = smul.addr %s2252, 8
          %s2259 = scalar_lea.vmem %s2, %s2258
          // Predicated region
          $region33: #{tpu_custom_call.1} parent=31 // pred_check
            %p2260 = pneg %p2257
          $region34: #{tpu_custom_call.1} parent=31 // pred_check_branch
            %2262 = sbr.rel (%p2260) target = $region36
          $region35: #{tpu_custom_call.1} parent=31 // pred_region
            // Predicated region
            $region37: #{tpu_custom_call.1} parent=35 // pred_check
              _
            $region38: #{tpu_custom_call.1} parent=35 // pred_check_branch
              %2264 = sbr.rel (0) target = $region40
            $region39: #{tpu_custom_call.1} parent=35 // pred_region
              // Predicated region
              $region59: #{tpu_custom_call.1} parent=39 // pred_check
                _
              $region60: #{tpu_custom_call.1} parent=39 // pred_check_branch
                %2376 = sbr.rel (0) target = $region62
              $region61: #{tpu_custom_call.1} parent=39 // pred_region
                %s2377 = sshrl.u32 %s2255, 5
                // While loop
                $region63: #{tpu_custom_call.1} parent=61 // loop_pre_header
                  _
                $region64: #{tpu_custom_call.1} parent=61 // loop_header
                  %s2379 = sphi 0, %s2381
                  %p2380 = scmp.ge.s32.totalorder %s2379, %s2377
                  %s2384 = sphi 0, %s2453
                  %s2385 = sphi %s2248, %s2456
                  %s2386 = sphi %s2259, %s2457
                $region65: #{tpu_custom_call.1} parent=61 // loop_header_branch
                  %2383 = sbr.rel (%p2380) target = $region69
                $region66: #{tpu_custom_call.1} parent=61 // loop_body
                  %v2387 = vld [vmem:[%s2385] sm:$0xff]
                  %2388 = vst [vmem:[%s2386] sm:$0xff] %v2387
                  %v2389 = vld [vmem:[%s2385 + $0x8] sm:$0xff]
                  %2390 = vst [vmem:[%s2386 + $0x8] sm:$0xff] %v2389
                  %v2391 = vld [vmem:[%s2385 + $0x10] sm:$0xff]
                  %2392 = vst [vmem:[%s2386 + $0x10] sm:$0xff] %v2391
                  %v2393 = vld [vmem:[%s2385 + $0x18] sm:$0xff]
                  %2394 = vst [vmem:[%s2386 + $0x18] sm:$0xff] %v2393
                  %v2395 = vld [vmem:[%s2385 + $0x20] sm:$0xff]
                  %2396 = vst [vmem:[%s2386 + $0x20] sm:$0xff] %v2395
                  %v2397 = vld [vmem:[%s2385 + $0x28] sm:$0xff]
                  %2398 = vst [vmem:[%s2386 + $0x28] sm:$0xff] %v2397
                  %v2399 = vld [vmem:[%s2385 + $0x30] sm:$0xff]
                  %2400 = vst [vmem:[%s2386 + $0x30] sm:$0xff] %v2399
                  %v2401 = vld [vmem:[%s2385 + $0x38] sm:$0xff]
                  %2402 = vst [vmem:[%s2386 + $0x38] sm:$0xff] %v2401
                  %v2403 = vld [vmem:[%s2385 + $0x40] sm:$0xff]
                  %2404 = vst [vmem:[%s2386 + $0x40] sm:$0xff] %v2403
                  %v2405 = vld [vmem:[%s2385 + $0x48] sm:$0xff]
                  %2406 = vst [vmem:[%s2386 + $0x48] sm:$0xff] %v2405
                  %v2407 = vld [vmem:[%s2385 + $0x50] sm:$0xff]
                  %2408 = vst [vmem:[%s2386 + $0x50] sm:$0xff] %v2407
                  %v2409 = vld [vmem:[%s2385 + $0x58] sm:$0xff]
                  %2410 = vst [vmem:[%s2386 + $0x58] sm:$0xff] %v2409
                  %v2411 = vld [vmem:[%s2385 + $0x60] sm:$0xff]
                  %2412 = vst [vmem:[%s2386 + $0x60] sm:$0xff] %v2411
                  %v2413 = vld [vmem:[%s2385 + $0x68] sm:$0xff]
                  %2414 = vst [vmem:[%s2386 + $0x68] sm:$0xff] %v2413
                  %v2415 = vld [vmem:[%s2385 + $0x70] sm:$0xff]
                  %2416 = vst [vmem:[%s2386 + $0x70] sm:$0xff] %v2415
                  %v2417 = vld [vmem:[%s2385 + $0x78] sm:$0xff]
                  %2418 = vst [vmem:[%s2386 + $0x78] sm:$0xff] %v2417
                  %v2419 = vld [vmem:[%s2385 + $0x80] sm:$0xff]
                  %2420 = vst [vmem:[%s2386 + $0x80] sm:$0xff] %v2419
                  %v2421 = vld [vmem:[%s2385 + $0x88] sm:$0xff]
                  %2422 = vst [vmem:[%s2386 + $0x88] sm:$0xff] %v2421
                  %v2423 = vld [vmem:[%s2385 + $0x90] sm:$0xff]
                  %2424 = vst [vmem:[%s2386 + $0x90] sm:$0xff] %v2423
                  %v2425 = vld [vmem:[%s2385 + $0x98] sm:$0xff]
                  %2426 = vst [vmem:[%s2386 + $0x98] sm:$0xff] %v2425
                  %v2427 = vld [vmem:[%s2385 + $0xa0] sm:$0xff]
                  %2428 = vst [vmem:[%s2386 + $0xa0] sm:$0xff] %v2427
                  %v2429 = vld [vmem:[%s2385 + $0xa8] sm:$0xff]
                  %2430 = vst [vmem:[%s2386 + $0xa8] sm:$0xff] %v2429
                  %v2431 = vld [vmem:[%s2385 + $0xb0] sm:$0xff]
                  %2432 = vst [vmem:[%s2386 + $0xb0] sm:$0xff] %v2431
                  %v2433 = vld [vmem:[%s2385 + $0xb8] sm:$0xff]
                  %2434 = vst [vmem:[%s2386 + $0xb8] sm:$0xff] %v2433
                  %v2435 = vld [vmem:[%s2385 + $0xc0] sm:$0xff]
                  %2436 = vst [vmem:[%s2386 + $0xc0] sm:$0xff] %v2435
                  %v2437 = vld [vmem:[%s2385 + $0xc8] sm:$0xff]
                  %2438 = vst [vmem:[%s2386 + $0xc8] sm:$0xff] %v2437
                  %v2439 = vld [vmem:[%s2385 + $0xd0] sm:$0xff]
                  %2440 = vst [vmem:[%s2386 + $0xd0] sm:$0xff] %v2439
                  %v2441 = vld [vmem:[%s2385 + $0xd8] sm:$0xff]
                  %2442 = vst [vmem:[%s2386 + $0xd8] sm:$0xff] %v2441
                  %v2443 = vld [vmem:[%s2385 + $0xe0] sm:$0xff]
                  %2444 = vst [vmem:[%s2386 + $0xe0] sm:$0xff] %v2443
                  %v2445 = vld [vmem:[%s2385 + $0xe8] sm:$0xff]
                  %2446 = vst [vmem:[%s2386 + $0xe8] sm:$0xff] %v2445
                  %v2447 = vld [vmem:[%s2385 + $0xf0] sm:$0xff]
                  %2448 = vst [vmem:[%s2386 + $0xf0] sm:$0xff] %v2447
                  %v2449 = vld [vmem:[%s2385 + $0xf8] sm:$0xff]
                  %2450 = vst [vmem:[%s2386 + $0xf8] sm:$0xff] %v2449
                  %s2451 = sadd.s32 1, %s2384
                  %p2452 = scmp.ge.s32.totalorder %s2451, %s2377
                  %s2453 = scalar_select %p2452, 0, %s2451
                  %s2454 = smul.u32 %s2453, 256
                  %s2455 = smul.u32 %s2453, 256
                  %s2456 = scalar_lea.vmem %s2248, %s2454 [#allocation2]
                  %s2457 = scalar_lea.vmem %s2259, %s2455
                $region67: #{tpu_custom_call.1} parent=61 // loop_footer
                  %s2381 = sadd.s32 %s2379, 1
                $region68: #{tpu_custom_call.1} parent=61 // loop_footer_branch
                  %2378 = sbr.rel target = $region64
                $region69: #{tpu_custom_call.1} parent=61 // loop_exit
                  _
                %s2458 = sshrl.u32 %s2255, 5
                %s2459 = sand.u32 %s2255, 31
                %s2460 = smul.u32 %s2458, 32
                %s2461 = smul.u32 8, %s2460
                %s2462 = scalar_lea.vmem %s2248, %s2461 [#allocation2]
                %s2463 = smul.u32 8, %s2460
                %s2464 = scalar_lea.vmem %s2259, %s2463
                // While loop
                $region70: #{tpu_custom_call.1} parent=61 // loop_pre_header
                  _
                $region71: #{tpu_custom_call.1} parent=61 // loop_header
                  %s2466 = sphi 0, %s2468
                  %p2467 = scmp.ge.s32.totalorder %s2466, %s2459
                  %s2471 = sphi 0, %s2478
                  %s2472 = sphi %s2462, %s2481
                  %s2473 = sphi %s2464, %s2482
                $region72: #{tpu_custom_call.1} parent=61 // loop_header_branch
                  %2470 = sbr.rel (%p2467) target = $region76
                $region73: #{tpu_custom_call.1} parent=61 // loop_body
                  %v2474 = vld [vmem:[%s2472] sm:$0xff]
                  %2475 = vst [vmem:[%s2473] sm:$0xff] %v2474
                  %s2476 = sadd.s32 1, %s2471
                  %p2477 = scmp.ge.s32.totalorder %s2476, %s2459
                  %s2478 = scalar_select %p2477, 0, %s2476
                  %s2479 = smul.u32 %s2478, 8
                  %s2480 = smul.u32 %s2478, 8
                  %s2481 = scalar_lea.vmem %s2462, %s2479 [#allocation2]
                  %s2482 = scalar_lea.vmem %s2464, %s2480
                $region74: #{tpu_custom_call.1} parent=61 // loop_footer
                  %s2468 = sadd.s32 %s2466, 1
                $region75: #{tpu_custom_call.1} parent=61 // loop_footer_branch
                  %2465 = sbr.rel target = $region71
                $region76: #{tpu_custom_call.1} parent=61 // loop_exit
                  _
              $region62: #{tpu_custom_call.1} parent=39 // pred_fallthru
                _
              // Predicated region
              $region77: #{tpu_custom_call.1} parent=39 // pred_check
                _
              $region78: #{tpu_custom_call.1} parent=39 // pred_check_branch
                %2484 = sbr.rel target = $region80
              $region79: #{tpu_custom_call.1} parent=39 // pred_region
                _
              $region80: #{tpu_custom_call.1} parent=39 // pred_fallthru
                _
            $region40: #{tpu_custom_call.1} parent=35 // pred_fallthru
              _
            // Predicated region
            $region41: #{tpu_custom_call.1} parent=35 // pred_check
              _
            $region42: #{tpu_custom_call.1} parent=35 // pred_check_branch
              %2266 = sbr.rel target = $region44
            $region43: #{tpu_custom_call.1} parent=35 // pred_region
              %s2268 = ssub.s32 256, 1
              %s2269 = sshrl.u32 %s2255, 5
              // While loop
              $region45: #{tpu_custom_call.1} parent=43 // loop_pre_header
                _
              $region46: #{tpu_custom_call.1} parent=43 // loop_header
                %s2271 = sphi 0, %s2273
                %p2272 = scmp.ge.s32.totalorder %s2271, %s2269
                %s2276 = sphi 0, %s2345
                %s2277 = sphi %s2248, %s2348
                %s2278 = sphi %s2259, %s2349
              $region47: #{tpu_custom_call.1} parent=43 // loop_header_branch
                %2275 = sbr.rel (%p2272) target = $region51
              $region48: #{tpu_custom_call.1} parent=43 // loop_body
                %v2279 = vld [vmem:[%s2277] sm:%s2268]
                %2280 = vst [vmem:[%s2278] sm:%s2268] %v2279
                %v2281 = vld [vmem:[%s2277 + $0x8] sm:%s2268]
                %2282 = vst [vmem:[%s2278 + $0x8] sm:%s2268] %v2281
                %v2283 = vld [vmem:[%s2277 + $0x10] sm:%s2268]
                %2284 = vst [vmem:[%s2278 + $0x10] sm:%s2268] %v2283
                %v2285 = vld [vmem:[%s2277 + $0x18] sm:%s2268]
                %2286 = vst [vmem:[%s2278 + $0x18] sm:%s2268] %v2285
                %v2287 = vld [vmem:[%s2277 + $0x20] sm:%s2268]
                %2288 = vst [vmem:[%s2278 + $0x20] sm:%s2268] %v2287
                %v2289 = vld [vmem:[%s2277 + $0x28] sm:%s2268]
                %2290 = vst [vmem:[%s2278 + $0x28] sm:%s2268] %v2289
                %v2291 = vld [vmem:[%s2277 + $0x30] sm:%s2268]
                %2292 = vst [vmem:[%s2278 + $0x30] sm:%s2268] %v2291
                %v2293 = vld [vmem:[%s2277 + $0x38] sm:%s2268]
                %2294 = vst [vmem:[%s2278 + $0x38] sm:%s2268] %v2293
                %v2295 = vld [vmem:[%s2277 + $0x40] sm:%s2268]
                %2296 = vst [vmem:[%s2278 + $0x40] sm:%s2268] %v2295
                %v2297 = vld [vmem:[%s2277 + $0x48] sm:%s2268]
                %2298 = vst [vmem:[%s2278 + $0x48] sm:%s2268] %v2297
                %v2299 = vld [vmem:[%s2277 + $0x50] sm:%s2268]
                %2300 = vst [vmem:[%s2278 + $0x50] sm:%s2268] %v2299
                %v2301 = vld [vmem:[%s2277 + $0x58] sm:%s2268]
                %2302 = vst [vmem:[%s2278 + $0x58] sm:%s2268] %v2301
                %v2303 = vld [vmem:[%s2277 + $0x60] sm:%s2268]
                %2304 = vst [vmem:[%s2278 + $0x60] sm:%s2268] %v2303
                %v2305 = vld [vmem:[%s2277 + $0x68] sm:%s2268]
                %2306 = vst [vmem:[%s2278 + $0x68] sm:%s2268] %v2305
                %v2307 = vld [vmem:[%s2277 + $0x70] sm:%s2268]
                %2308 = vst [vmem:[%s2278 + $0x70] sm:%s2268] %v2307
                %v2309 = vld [vmem:[%s2277 + $0x78] sm:%s2268]
                %2310 = vst [vmem:[%s2278 + $0x78] sm:%s2268] %v2309
                %v2311 = vld [vmem:[%s2277 + $0x80] sm:%s2268]
                %2312 = vst [vmem:[%s2278 + $0x80] sm:%s2268] %v2311
                %v2313 = vld [vmem:[%s2277 + $0x88] sm:%s2268]
                %2314 = vst [vmem:[%s2278 + $0x88] sm:%s2268] %v2313
                %v2315 = vld [vmem:[%s2277 + $0x90] sm:%s2268]
                %2316 = vst [vmem:[%s2278 + $0x90] sm:%s2268] %v2315
                %v2317 = vld [vmem:[%s2277 + $0x98] sm:%s2268]
                %2318 = vst [vmem:[%s2278 + $0x98] sm:%s2268] %v2317
                %v2319 = vld [vmem:[%s2277 + $0xa0] sm:%s2268]
                %2320 = vst [vmem:[%s2278 + $0xa0] sm:%s2268] %v2319
                %v2321 = vld [vmem:[%s2277 + $0xa8] sm:%s2268]
                %2322 = vst [vmem:[%s2278 + $0xa8] sm:%s2268] %v2321
                %v2323 = vld [vmem:[%s2277 + $0xb0] sm:%s2268]
                %2324 = vst [vmem:[%s2278 + $0xb0] sm:%s2268] %v2323
                %v2325 = vld [vmem:[%s2277 + $0xb8] sm:%s2268]
                %2326 = vst [vmem:[%s2278 + $0xb8] sm:%s2268] %v2325
                %v2327 = vld [vmem:[%s2277 + $0xc0] sm:%s2268]
                %2328 = vst [vmem:[%s2278 + $0xc0] sm:%s2268] %v2327
                %v2329 = vld [vmem:[%s2277 + $0xc8] sm:%s2268]
                %2330 = vst [vmem:[%s2278 + $0xc8] sm:%s2268] %v2329
                %v2331 = vld [vmem:[%s2277 + $0xd0] sm:%s2268]
                %2332 = vst [vmem:[%s2278 + $0xd0] sm:%s2268] %v2331
                %v2333 = vld [vmem:[%s2277 + $0xd8] sm:%s2268]
                %2334 = vst [vmem:[%s2278 + $0xd8] sm:%s2268] %v2333
                %v2335 = vld [vmem:[%s2277 + $0xe0] sm:%s2268]
                %2336 = vst [vmem:[%s2278 + $0xe0] sm:%s2268] %v2335
                %v2337 = vld [vmem:[%s2277 + $0xe8] sm:%s2268]
                %2338 = vst [vmem:[%s2278 + $0xe8] sm:%s2268] %v2337
                %v2339 = vld [vmem:[%s2277 + $0xf0] sm:%s2268]
                %2340 = vst [vmem:[%s2278 + $0xf0] sm:%s2268] %v2339
                %v2341 = vld [vmem:[%s2277 + $0xf8] sm:%s2268]
                %2342 = vst [vmem:[%s2278 + $0xf8] sm:%s2268] %v2341
                %s2343 = sadd.s32 1, %s2276
                %p2344 = scmp.ge.s32.totalorder %s2343, %s2269
                %s2345 = scalar_select %p2344, 0, %s2343
                %s2346 = smul.u32 %s2345, 256
                %s2347 = smul.u32 %s2345, 256
                %s2348 = scalar_lea.vmem %s2248, %s2346 [#allocation2]
                %s2349 = scalar_lea.vmem %s2259, %s2347
              $region49: #{tpu_custom_call.1} parent=43 // loop_footer
                %s2273 = sadd.s32 %s2271, 1
              $region50: #{tpu_custom_call.1} parent=43 // loop_footer_branch
                %2270 = sbr.rel target = $region46
              $region51: #{tpu_custom_call.1} parent=43 // loop_exit
                _
              %s2350 = sshrl.u32 %s2255, 5
              %s2351 = sand.u32 %s2255, 31
              %s2352 = smul.u32 %s2350, 32
              %s2353 = smul.u32 8, %s2352
              %s2354 = scalar_lea.vmem %s2248, %s2353 [#allocation2]
              %s2355 = smul.u32 8, %s2352
              %s2356 = scalar_lea.vmem %s2259, %s2355
              // While loop
              $region52: #{tpu_custom_call.1} parent=43 // loop_pre_header
                _
              $region53: #{tpu_custom_call.1} parent=43 // loop_header
                %s2358 = sphi 0, %s2360
                %p2359 = scmp.ge.s32.totalorder %s2358, %s2351
                %s2363 = sphi 0, %s2370
                %s2364 = sphi %s2354, %s2373
                %s2365 = sphi %s2356, %s2374
              $region54: #{tpu_custom_call.1} parent=43 // loop_header_branch
                %2362 = sbr.rel (%p2359) target = $region58
              $region55: #{tpu_custom_call.1} parent=43 // loop_body
                %v2366 = vld [vmem:[%s2364] sm:%s2268]
                %2367 = vst [vmem:[%s2365] sm:%s2268] %v2366
                %s2368 = sadd.s32 1, %s2363
                %p2369 = scmp.ge.s32.totalorder %s2368, %s2351
                %s2370 = scalar_select %p2369, 0, %s2368
                %s2371 = smul.u32 %s2370, 8
                %s2372 = smul.u32 %s2370, 8
                %s2373 = scalar_lea.vmem %s2354, %s2371 [#allocation2]
                %s2374 = scalar_lea.vmem %s2356, %s2372
              $region56: #{tpu_custom_call.1} parent=43 // loop_footer
                %s2360 = sadd.s32 %s2358, 1
              $region57: #{tpu_custom_call.1} parent=43 // loop_footer_branch
                %2357 = sbr.rel target = $region53
              $region58: #{tpu_custom_call.1} parent=43 // loop_exit
                _
            $region44: #{tpu_custom_call.1} parent=35 // pred_fallthru
              _
          $region36: #{tpu_custom_call.1} parent=31 // pred_fallthru
            _
          %2485 = vnop
        $region32: #{tpu_custom_call.1} parent=27 // pred_fallthru
          _
      $region28: #{tpu_custom_call.1} parent=5 // pred_fallthru
        _
      %p2486 = scmp.le.s32.totalorder 2, %s8
      // Predicated region
      $region81: #{tpu_custom_call.1} parent=5 // pred_check
        %p2487 = pneg %p2486
      $region82: #{tpu_custom_call.1} parent=5 // pred_check_branch
        %2489 = sbr.rel (%p2487) target = $region84
      $region83: #{tpu_custom_call.1} parent=5 // pred_region
        %s2490 = ssub.s32 %s8, 2
        // Predicated region
        $region85: #{tpu_custom_call.1} parent=83 // pred_check
          %p2491 = pneg %p84
        $region86: #{tpu_custom_call.1} parent=83 // pred_check_branch
          %2493 = sbr.rel (%p2491) target = $region88
        $region87: #{tpu_custom_call.1} parent=83 // pred_region
          %s2494 = sand.u32 %s69, 1
          %s2495 = sand.u32 %s69, 1
          %s2496 = smul.addr %s2495, 2056
          %s2497 = scalar_lea.vmem [#allocation2], %s2496
        $region88: #{tpu_custom_call.1} parent=83 // pred_fallthru
          _
      $region84: #{tpu_custom_call.1} parent=5 // pred_fallthru
        _
    $region6: #{tpu_custom_call.1} parent=1 // loop_footer
      %s12 = sadd.s32 1, %s8
    $region7: #{tpu_custom_call.1} parent=1 // loop_footer_branch
      %7 = sbr.rel target = $region3
    $region8: #{tpu_custom_call.1} parent=1 // loop_exit
      _

</llo_original>
